<compile_context>
chip_gen: v5e
topology: v5e:2x2
jax: 0.10.0
libtpu: 0.0.40
codegen_flags: <defaults>
</compile_context>

<pallas_src>
import functools

import jax
import jax.numpy as jnp
from jax import lax
from jax.experimental import pallas as pl
from jax.experimental.pallas import tpu as pltpu


# --------------------------------------------------------------------------
# Fused Anderson-DEQ kernel: one grid step per batch sample.
#   x_ref : (1, C, HW)  VMEM   (NCHW sample, HW on lanes)
#   w_ref : (C, C)      SMEM   (channel-mixing weight, read as scalars)
#   o_ref : (1, C, HW)  VMEM   (z* = best iterate)
#   X_s, F_s : (m, C, HW) VMEM scratch (Anderson history)
# --------------------------------------------------------------------------
def _deq_anderson_kernel(x_ref, w_ref, o_ref, X_s, F_s, *,
                         C, m, threshold, lam, beta, eps):
    x = x_ref[0].astype(jnp.float32)                    # (C, HW)

    # weight scalars from SMEM (hoisted once)
    w = [[w_ref[c, cp] for cp in range(C)] for c in range(C)]

    def f(z):
        # y[cp, :] = tanh(x[cp, :] + sum_c W[c, cp] * z[c, :])
        # C*C scalar-broadcast FMAs on (1, HW) rows -> pure VPU + EUP(tanh).
        rows = []
        for cp in range(C):
            acc = x[cp:cp + 1, :]
            for c in range(C):
                acc = acc + w[c][cp] * z[c:c + 1, :]
            rows.append(acc)
        return jnp.tanh(jnp.concatenate(rows, axis=0))  # (C, HW)

    # Zero the history so unwritten slots contribute exactly 0 to the Gram.
    X_s[...] = jnp.zeros_like(X_s)
    F_s[...] = jnp.zeros_like(F_s)

    z0 = x
    f0 = f(z0)
    X_s[0] = z0
    F_s[0] = f0
    f1 = f(f0)
    X_s[1] = f0
    F_s[1] = f1

    def body(k, carry):
        best_z, best_rel, done = carry
        n = jnp.minimum(k, m)                           # active window size

        X_rows = [X_s[i] for i in range(m)]
        F_rows = [F_s[i] for i in range(m)]
        G_rows = [F_rows[i] - X_rows[i] for i in range(m)]

        act = [(n > i).astype(jnp.float32) for i in range(m)]

        # Gram scalars GGt[i][j] = <G_i, G_j>  (VPU multiply + reduce).
        ggt = [[None] * m for _ in range(m)]
        for i in range(m):
            for j in range(i, m):
                s = jnp.sum(G_rows[i] * G_rows[j])
                ggt[i][j] = s
                ggt[j][i] = s

        # Bordered Anderson solve, reduced form:
        #   alpha = A^{-1} 1 / (1^T A^{-1} 1),  A = GG^T + lam*I on the active
        # block.  Pad inactive rows/cols with the identity and a zero RHS so
        # the padded solve has alpha_j = 0 there (uniform shape for fori_loop).
        A = [[ggt[i][j] * act[i] * act[j] +
              ((lam * act[i] + (1.0 - act[i])) if i == j else 0.0)
              for j in range(m)] for i in range(m)]
        b = [act[i] for i in range(m)]

        # Unrolled Gauss-Jordan (A is SPD on the active block, identity else).
        for i in range(m):
            inv = 1.0 / A[i][i]
            for r in range(m):
                if r == i:
                    continue
                fac = A[r][i] * inv
                for c2 in range(i + 1, m):
                    A[r][c2] = A[r][c2] - fac * A[i][c2]
                b[r] = b[r] - fac * b[i]
        u = [b[i] / A[i][i] for i in range(m)]
        ssum = u[0]
        for i in range(1, m):
            ssum = ssum + u[i]
        inv_ssum = 1.0 / ssum
        alpha = [u[i] * inv_ssum for i in range(m)]

        # Anderson mixing (beta is a Python float; beta == 1.0 folds at trace).
        if beta == 1.0:
            comb = F_rows
        else:
            comb = [beta * F_rows[i] + (1.0 - beta) * X_rows[i]
                    for i in range(m)]
        xk = alpha[0] * comb[0]
        for i in range(1, m):
            xk = xk + alpha[i] * comb[i]

        fk = f(xk)
        idx = k % m
        X_s[idx] = xk
        F_s[idx] = fk

        # Per-sample residuals (review: track residual per sample, not global).
        gx = fk - xk
        abs_d = jnp.sqrt(jnp.sum(gx * gx))
        rel_d = abs_d / (1e-5 + jnp.sqrt(jnp.sum(fk * fk)))

        not_done = jnp.logical_not(done)
        improve = jnp.logical_and(not_done, rel_d < best_rel)
        best_z = jnp.where(improve, xk, best_z)
        best_rel = jnp.where(improve, rel_d, best_rel)
        # reference breaks after updating `lowest` when rel < eps; here we
        # freeze the tracked best instead (fixed trip-count fori_loop).
        done = jnp.logical_or(done, rel_d < eps)
        return best_z, best_rel, done

    init = (z0, jnp.array(jnp.inf, jnp.float32), jnp.array(False))
    best_z, _, _ = lax.fori_loop(2, threshold, body, init)
    o_ref[0] = best_z.astype(o_ref.dtype)


def deq_anderson_pallas(x_chw, weight, *, m=5, threshold=40, lam=1e-4,
                        beta=1.0, eps=1e-3):
    """x_chw: (B, C, HW), weight: (C, C). Returns z*: (B, C, HW)."""
    B, C, HW = x_chw.shape
    kernel = functools.partial(
        _deq_anderson_kernel, C=C, m=m, threshold=threshold,
        lam=lam, beta=beta, eps=eps)
    return pl.pallas_call(
        kernel,
        out_shape=jax.ShapeDtypeStruct((B, C, HW), x_chw.dtype),
        grid=(B,),
        in_specs=[
            pl.BlockSpec((1, C, HW), lambda b: (b, 0, 0)),           # x (VMEM)
            pl.BlockSpec(memory_space=pltpu.MemorySpace.SMEM),       # W (SMEM)
        ],
        out_specs=pl.BlockSpec((1, C, HW), lambda b: (b, 0, 0)),
        scratch_shapes=[
            pltpu.VMEM((m, C, HW), jnp.float32),                     # X history
            pltpu.VMEM((m, C, HW), jnp.float32),                     # F history
        ],
        compiler_params=pltpu.CompilerParams(
            dimension_semantics=("parallel",),   # batch splits across cores
        ),
    )(x_chw, weight.astype(jnp.float32))


# --------------------------------------------------------------------------
# DEQ module (eval-mode forward).  fn(z, x) = tanh(channel-mix(z, W) + x).
# --------------------------------------------------------------------------
class DEQPallas:
    def __init__(self, weight, f_thres=40, b_thres=40,
                 m=5, lam=1e-4, eps=1e-3, beta=1.0):
        self.weight = weight
        self.f_thres = f_thres
        self.b_thres = b_thres            # unused in eval forward
        self.m, self.lam, self.eps, self.beta = m, lam, eps, beta

    def __call__(self, x_nchw, f_thres=None):
        f_thres = self.f_thres if f_thres is None else f_thres
        B, C, H, W = x_nchw.shape
        x_chw = x_nchw.reshape(B, C, H * W)          # NCHW is already (C, HW)
        z = deq_anderson_pallas(
            x_chw, self.weight, m=self.m, threshold=f_thres,
            lam=self.lam, beta=self.beta, eps=self.eps)
        return z.reshape(B, C, H, W)


if __name__ == "__main__":
    key = jax.random.PRNGKey(0)
    k1, k2 = jax.random.split(key)

    B, C, H, W = 2, 4, 16, 16
    x = jax.random.normal(k1, (B, C, H, W), dtype=jnp.float32)

    # Contraction weight (spectral norm well below 1 -> fixed point exists);
    # fn(z, x) = tanh(z (.) Wmat + x)  (a 1x1 conv / channel-mixing map).
    Wmat = jax.random.normal(k2, (C, C), dtype=jnp.float32) * (0.3 / jnp.sqrt(C))

    deq = DEQPallas(Wmat, f_thres=20)
    out = jax.block_until_ready(deq(x))

    assert out.shape == (B, C, H, W) and out.dtype == jnp.float32

    # Reference fixed-point map in plain JAX (same math, NCHW-flattened).
    def fn_ref(z_chw, x_chw):
        return jnp.tanh(jnp.einsum('cd,bch->bdh', Wmat, z_chw) + x_chw)

    x_chw = x.reshape(B, C, H * W)
    z_chw = out.reshape(B, C, H * W)

    # 1) the returned iterate is (numerically) a fixed point
    resid = jnp.linalg.norm(fn_ref(z_chw, x_chw) - z_chw)
    assert bool(jnp.isfinite(resid))
    assert float(resid) < 0.1

    # 2) agreement with the true fixed point (plain-JAX Picard iteration)
    z_true = x_chw
    for _ in range(200):
        z_true = fn_ref(z_true, x_chw)
    assert float(jnp.linalg.norm(z_chw - z_true)) < 0.1

    print("KERNEL_OK")
</pallas_src>

<mosaic_0001>
module attributes {stable_mosaic.version = 11 : i64} {
  func.func @_deq_anderson_kernel(%arg0: i32, %arg1: memref<1x4x256xf32, #tpu.memory_space<vmem>>, %arg2: memref<4x4xf32, #tpu.memory_space<smem>>, %arg3: memref<1x4x256xf32, #tpu.memory_space<vmem>>, %arg4: memref<5x4x256xf32, #tpu.memory_space<vmem>>, %arg5: memref<5x4x256xf32, #tpu.memory_space<vmem>>) attributes {dimension_semantics = [#tpu.dimension_semantics<parallel>], iteration_bounds = array<i64: 2>, scalar_prefetch = 0 : i64, scratch_operands = 2 : i64, tpu.core_type = #tpu.core_type<tc>, window_params = [{transform_indices = @transform_0, window_bounds = array<i64: 1, 4, 256>}, {transform_indices = @transform_1, window_bounds = array<i64: 4, 4>}, {transform_indices = @transform_2, window_bounds = array<i64: 1, 4, 256>}]} {
    %c0 = arith.constant 0 : index
    %c0_0 = arith.constant 0 : index
    %c0_1 = arith.constant 0 : index
    %0 = vector.load %arg1[%c0, %c0_0, %c0_1] : memref<1x4x256xf32, #tpu.memory_space<vmem>>, vector<1x4x256xf32>
    %1 = vector.shape_cast %0 : vector<1x4x256xf32> to vector<4x256xf32>
    %c0_2 = arith.constant 0 : index
    %c0_3 = arith.constant 0 : index
    %2 = memref.load %arg2[%c0_2, %c0_3] : memref<4x4xf32, #tpu.memory_space<smem>>
    %c0_4 = arith.constant 0 : index
    %c1 = arith.constant 1 : index
    %3 = memref.load %arg2[%c0_4, %c1] : memref<4x4xf32, #tpu.memory_space<smem>>
    %c0_5 = arith.constant 0 : index
    %c2 = arith.constant 2 : index
    %4 = memref.load %arg2[%c0_5, %c2] : memref<4x4xf32, #tpu.memory_space<smem>>
    %c0_6 = arith.constant 0 : index
    %c3 = arith.constant 3 : index
    %5 = memref.load %arg2[%c0_6, %c3] : memref<4x4xf32, #tpu.memory_space<smem>>
    %c1_7 = arith.constant 1 : index
    %c0_8 = arith.constant 0 : index
    %6 = memref.load %arg2[%c1_7, %c0_8] : memref<4x4xf32, #tpu.memory_space<smem>>
    %c1_9 = arith.constant 1 : index
    %c1_10 = arith.constant 1 : index
    %7 = memref.load %arg2[%c1_9, %c1_10] : memref<4x4xf32, #tpu.memory_space<smem>>
    %c1_11 = arith.constant 1 : index
    %c2_12 = arith.constant 2 : index
    %8 = memref.load %arg2[%c1_11, %c2_12] : memref<4x4xf32, #tpu.memory_space<smem>>
    %c1_13 = arith.constant 1 : index
    %c3_14 = arith.constant 3 : index
    %9 = memref.load %arg2[%c1_13, %c3_14] : memref<4x4xf32, #tpu.memory_space<smem>>
    %c2_15 = arith.constant 2 : index
    %c0_16 = arith.constant 0 : index
    %10 = memref.load %arg2[%c2_15, %c0_16] : memref<4x4xf32, #tpu.memory_space<smem>>
    %c2_17 = arith.constant 2 : index
    %c1_18 = arith.constant 1 : index
    %11 = memref.load %arg2[%c2_17, %c1_18] : memref<4x4xf32, #tpu.memory_space<smem>>
    %c2_19 = arith.constant 2 : index
    %c2_20 = arith.constant 2 : index
    %12 = memref.load %arg2[%c2_19, %c2_20] : memref<4x4xf32, #tpu.memory_space<smem>>
    %c2_21 = arith.constant 2 : index
    %c3_22 = arith.constant 3 : index
    %13 = memref.load %arg2[%c2_21, %c3_22] : memref<4x4xf32, #tpu.memory_space<smem>>
    %c3_23 = arith.constant 3 : index
    %c0_24 = arith.constant 0 : index
    %14 = memref.load %arg2[%c3_23, %c0_24] : memref<4x4xf32, #tpu.memory_space<smem>>
    %c3_25 = arith.constant 3 : index
    %c1_26 = arith.constant 1 : index
    %15 = memref.load %arg2[%c3_25, %c1_26] : memref<4x4xf32, #tpu.memory_space<smem>>
    %c3_27 = arith.constant 3 : index
    %c2_28 = arith.constant 2 : index
    %16 = memref.load %arg2[%c3_27, %c2_28] : memref<4x4xf32, #tpu.memory_space<smem>>
    %c3_29 = arith.constant 3 : index
    %c3_30 = arith.constant 3 : index
    %17 = memref.load %arg2[%c3_29, %c3_30] : memref<4x4xf32, #tpu.memory_space<smem>>
    %cst = arith.constant 0.000000e+00 : f32
    %18 = vector.broadcast %cst : f32 to vector<5x4x256xf32>
    %c0_31 = arith.constant 0 : index
    %c0_32 = arith.constant 0 : index
    %c0_33 = arith.constant 0 : index
    %19 = vector.load %arg4[%c0_31, %c0_32, %c0_33] : memref<5x4x256xf32, #tpu.memory_space<vmem>>, vector<5x4x256xf32>
    tpu.vector_store %arg4[%c0_31, %c0_32, %c0_33], %18 {strides = array<i32>} : memref<5x4x256xf32, #tpu.memory_space<vmem>>, vector<5x4x256xf32>,
    %cst_34 = arith.constant 0.000000e+00 : f32
    %20 = vector.broadcast %cst_34 : f32 to vector<5x4x256xf32>
    %c0_35 = arith.constant 0 : index
    %c0_36 = arith.constant 0 : index
    %c0_37 = arith.constant 0 : index
    %21 = vector.load %arg5[%c0_35, %c0_36, %c0_37] : memref<5x4x256xf32, #tpu.memory_space<vmem>>, vector<5x4x256xf32>
    tpu.vector_store %arg5[%c0_35, %c0_36, %c0_37], %20 {strides = array<i32>} : memref<5x4x256xf32, #tpu.memory_space<vmem>>, vector<5x4x256xf32>,
    %22 = vector.extract_strided_slice %1 {offsets = [0, 0], sizes = [1, 256], strides = [1, 1]} : vector<4x256xf32> to vector<1x256xf32>
    %23 = vector.extract_strided_slice %1 {offsets = [0, 0], sizes = [1, 256], strides = [1, 1]} : vector<4x256xf32> to vector<1x256xf32>
    %24 = vector.broadcast %2 : f32 to vector<1x256xf32>
    %25 = arith.mulf %24, %23 : vector<1x256xf32>
    %26 = arith.addf %22, %25 : vector<1x256xf32>
    %27 = vector.extract_strided_slice %1 {offsets = [1, 0], sizes = [1, 256], strides = [1, 1]} : vector<4x256xf32> to vector<1x256xf32>
    %28 = vector.broadcast %6 : f32 to vector<1x256xf32>
    %29 = arith.mulf %28, %27 : vector<1x256xf32>
    %30 = arith.addf %26, %29 : vector<1x256xf32>
    %31 = vector.extract_strided_slice %1 {offsets = [2, 0], sizes = [1, 256], strides = [1, 1]} : vector<4x256xf32> to vector<1x256xf32>
    %32 = vector.broadcast %10 : f32 to vector<1x256xf32>
    %33 = arith.mulf %32, %31 : vector<1x256xf32>
    %34 = arith.addf %30, %33 : vector<1x256xf32>
    %35 = vector.extract_strided_slice %1 {offsets = [3, 0], sizes = [1, 256], strides = [1, 1]} : vector<4x256xf32> to vector<1x256xf32>
    %36 = vector.broadcast %14 : f32 to vector<1x256xf32>
    %37 = arith.mulf %36, %35 : vector<1x256xf32>
    %38 = arith.addf %34, %37 : vector<1x256xf32>
    %39 = vector.extract_strided_slice %1 {offsets = [1, 0], sizes = [1, 256], strides = [1, 1]} : vector<4x256xf32> to vector<1x256xf32>
    %40 = vector.extract_strided_slice %1 {offsets = [0, 0], sizes = [1, 256], strides = [1, 1]} : vector<4x256xf32> to vector<1x256xf32>
    %41 = vector.broadcast %3 : f32 to vector<1x256xf32>
    %42 = arith.mulf %41, %40 : vector<1x256xf32>
    %43 = arith.addf %39, %42 : vector<1x256xf32>
    %44 = vector.extract_strided_slice %1 {offsets = [1, 0], sizes = [1, 256], strides = [1, 1]} : vector<4x256xf32> to vector<1x256xf32>
    %45 = vector.broadcast %7 : f32 to vector<1x256xf32>
    %46 = arith.mulf %45, %44 : vector<1x256xf32>
    %47 = arith.addf %43, %46 : vector<1x256xf32>
    %48 = vector.extract_strided_slice %1 {offsets = [2, 0], sizes = [1, 256], strides = [1, 1]} : vector<4x256xf32> to vector<1x256xf32>
    %49 = vector.broadcast %11 : f32 to vector<1x256xf32>
    %50 = arith.mulf %49, %48 : vector<1x256xf32>
    %51 = arith.addf %47, %50 : vector<1x256xf32>
    %52 = vector.extract_strided_slice %1 {offsets = [3, 0], sizes = [1, 256], strides = [1, 1]} : vector<4x256xf32> to vector<1x256xf32>
    %53 = vector.broadcast %15 : f32 to vector<1x256xf32>
    %54 = arith.mulf %53, %52 : vector<1x256xf32>
    %55 = arith.addf %51, %54 : vector<1x256xf32>
    %56 = vector.extract_strided_slice %1 {offsets = [2, 0], sizes = [1, 256], strides = [1, 1]} : vector<4x256xf32> to vector<1x256xf32>
    %57 = vector.extract_strided_slice %1 {offsets = [0, 0], sizes = [1, 256], strides = [1, 1]} : vector<4x256xf32> to vector<1x256xf32>
    %58 = vector.broadcast %4 : f32 to vector<1x256xf32>
    %59 = arith.mulf %58, %57 : vector<1x256xf32>
    %60 = arith.addf %56, %59 : vector<1x256xf32>
    %61 = vector.extract_strided_slice %1 {offsets = [1, 0], sizes = [1, 256], strides = [1, 1]} : vector<4x256xf32> to vector<1x256xf32>
    %62 = vector.broadcast %8 : f32 to vector<1x256xf32>
    %63 = arith.mulf %62, %61 : vector<1x256xf32>
    %64 = arith.addf %60, %63 : vector<1x256xf32>
    %65 = vector.extract_strided_slice %1 {offsets = [2, 0], sizes = [1, 256], strides = [1, 1]} : vector<4x256xf32> to vector<1x256xf32>
    %66 = vector.broadcast %12 : f32 to vector<1x256xf32>
    %67 = arith.mulf %66, %65 : vector<1x256xf32>
    %68 = arith.addf %64, %67 : vector<1x256xf32>
    %69 = vector.extract_strided_slice %1 {offsets = [3, 0], sizes = [1, 256], strides = [1, 1]} : vector<4x256xf32> to vector<1x256xf32>
    %70 = vector.broadcast %16 : f32 to vector<1x256xf32>
    %71 = arith.mulf %70, %69 : vector<1x256xf32>
    %72 = arith.addf %68, %71 : vector<1x256xf32>
    %73 = vector.extract_strided_slice %1 {offsets = [3, 0], sizes = [1, 256], strides = [1, 1]} : vector<4x256xf32> to vector<1x256xf32>
    %74 = vector.extract_strided_slice %1 {offsets = [0, 0], sizes = [1, 256], strides = [1, 1]} : vector<4x256xf32> to vector<1x256xf32>
    %75 = vector.broadcast %5 : f32 to vector<1x256xf32>
    %76 = arith.mulf %75, %74 : vector<1x256xf32>
    %77 = arith.addf %73, %76 : vector<1x256xf32>
    %78 = vector.extract_strided_slice %1 {offsets = [1, 0], sizes = [1, 256], strides = [1, 1]} : vector<4x256xf32> to vector<1x256xf32>
    %79 = vector.broadcast %9 : f32 to vector<1x256xf32>
    %80 = arith.mulf %79, %78 : vector<1x256xf32>
    %81 = arith.addf %77, %80 : vector<1x256xf32>
    %82 = vector.extract_strided_slice %1 {offsets = [2, 0], sizes = [1, 256], strides = [1, 1]} : vector<4x256xf32> to vector<1x256xf32>
    %83 = vector.broadcast %13 : f32 to vector<1x256xf32>
    %84 = arith.mulf %83, %82 : vector<1x256xf32>
    %85 = arith.addf %81, %84 : vector<1x256xf32>
    %86 = vector.extract_strided_slice %1 {offsets = [3, 0], sizes = [1, 256], strides = [1, 1]} : vector<4x256xf32> to vector<1x256xf32>
    %87 = vector.broadcast %17 : f32 to vector<1x256xf32>
    %88 = arith.mulf %87, %86 : vector<1x256xf32>
    %89 = arith.addf %85, %88 : vector<1x256xf32>
    %90 = tpu.concatenate %38, %55, %72, %89 in 0 : vector<1x256xf32>, vector<1x256xf32>, vector<1x256xf32>, vector<1x256xf32> -> vector<4x256xf32>
    %91 = math.tanh %90 : vector<4x256xf32>
    %c0_38 = arith.constant 0 : index
    %c0_39 = arith.constant 0 : index
    %c0_40 = arith.constant 0 : index
    %92 = vector.load %arg4[%c0_38, %c0_39, %c0_40] : memref<5x4x256xf32, #tpu.memory_space<vmem>>, vector<1x4x256xf32>
    %93 = vector.shape_cast %92 : vector<1x4x256xf32> to vector<4x256xf32>
    %94 = vector.shape_cast %1 : vector<4x256xf32> to vector<1x4x256xf32>
    tpu.vector_store %arg4[%c0_38, %c0_39, %c0_40], %94 {strides = array<i32>} : memref<5x4x256xf32, #tpu.memory_space<vmem>>, vector<1x4x256xf32>,
    %c0_41 = arith.constant 0 : index
    %c0_42 = arith.constant 0 : index
    %c0_43 = arith.constant 0 : index
    %95 = vector.load %arg5[%c0_41, %c0_42, %c0_43] : memref<5x4x256xf32, #tpu.memory_space<vmem>>, vector<1x4x256xf32>
    %96 = vector.shape_cast %95 : vector<1x4x256xf32> to vector<4x256xf32>
    %97 = vector.shape_cast %91 : vector<4x256xf32> to vector<1x4x256xf32>
    tpu.vector_store %arg5[%c0_41, %c0_42, %c0_43], %97 {strides = array<i32>} : memref<5x4x256xf32, #tpu.memory_space<vmem>>, vector<1x4x256xf32>,
    %98 = vector.extract_strided_slice %1 {offsets = [0, 0], sizes = [1, 256], strides = [1, 1]} : vector<4x256xf32> to vector<1x256xf32>
    %99 = vector.extract_strided_slice %91 {offsets = [0, 0], sizes = [1, 256], strides = [1, 1]} : vector<4x256xf32> to vector<1x256xf32>
    %100 = vector.broadcast %2 : f32 to vector<1x256xf32>
    %101 = arith.mulf %100, %99 : vector<1x256xf32>
    %102 = arith.addf %98, %101 : vector<1x256xf32>
    %103 = vector.extract_strided_slice %91 {offsets = [1, 0], sizes = [1, 256], strides = [1, 1]} : vector<4x256xf32> to vector<1x256xf32>
    %104 = vector.broadcast %6 : f32 to vector<1x256xf32>
    %105 = arith.mulf %104, %103 : vector<1x256xf32>
    %106 = arith.addf %102, %105 : vector<1x256xf32>
    %107 = vector.extract_strided_slice %91 {offsets = [2, 0], sizes = [1, 256], strides = [1, 1]} : vector<4x256xf32> to vector<1x256xf32>
    %108 = vector.broadcast %10 : f32 to vector<1x256xf32>
    %109 = arith.mulf %108, %107 : vector<1x256xf32>
    %110 = arith.addf %106, %109 : vector<1x256xf32>
    %111 = vector.extract_strided_slice %91 {offsets = [3, 0], sizes = [1, 256], strides = [1, 1]} : vector<4x256xf32> to vector<1x256xf32>
    %112 = vector.broadcast %14 : f32 to vector<1x256xf32>
    %113 = arith.mulf %112, %111 : vector<1x256xf32>
    %114 = arith.addf %110, %113 : vector<1x256xf32>
    %115 = vector.extract_strided_slice %1 {offsets = [1, 0], sizes = [1, 256], strides = [1, 1]} : vector<4x256xf32> to vector<1x256xf32>
    %116 = vector.extract_strided_slice %91 {offsets = [0, 0], sizes = [1, 256], strides = [1, 1]} : vector<4x256xf32> to vector<1x256xf32>
    %117 = vector.broadcast %3 : f32 to vector<1x256xf32>
    %118 = arith.mulf %117, %116 : vector<1x256xf32>
    %119 = arith.addf %115, %118 : vector<1x256xf32>
    %120 = vector.extract_strided_slice %91 {offsets = [1, 0], sizes = [1, 256], strides = [1, 1]} : vector<4x256xf32> to vector<1x256xf32>
    %121 = vector.broadcast %7 : f32 to vector<1x256xf32>
    %122 = arith.mulf %121, %120 : vector<1x256xf32>
    %123 = arith.addf %119, %122 : vector<1x256xf32>
    %124 = vector.extract_strided_slice %91 {offsets = [2, 0], sizes = [1, 256], strides = [1, 1]} : vector<4x256xf32> to vector<1x256xf32>
    %125 = vector.broadcast %11 : f32 to vector<1x256xf32>
    %126 = arith.mulf %125, %124 : vector<1x256xf32>
    %127 = arith.addf %123, %126 : vector<1x256xf32>
    %128 = vector.extract_strided_slice %91 {offsets = [3, 0], sizes = [1, 256], strides = [1, 1]} : vector<4x256xf32> to vector<1x256xf32>
    %129 = vector.broadcast %15 : f32 to vector<1x256xf32>
    %130 = arith.mulf %129, %128 : vector<1x256xf32>
    %131 = arith.addf %127, %130 : vector<1x256xf32>
    %132 = vector.extract_strided_slice %1 {offsets = [2, 0], sizes = [1, 256], strides = [1, 1]} : vector<4x256xf32> to vector<1x256xf32>
    %133 = vector.extract_strided_slice %91 {offsets = [0, 0], sizes = [1, 256], strides = [1, 1]} : vector<4x256xf32> to vector<1x256xf32>
    %134 = vector.broadcast %4 : f32 to vector<1x256xf32>
    %135 = arith.mulf %134, %133 : vector<1x256xf32>
    %136 = arith.addf %132, %135 : vector<1x256xf32>
    %137 = vector.extract_strided_slice %91 {offsets = [1, 0], sizes = [1, 256], strides = [1, 1]} : vector<4x256xf32> to vector<1x256xf32>
    %138 = vector.broadcast %8 : f32 to vector<1x256xf32>
    %139 = arith.mulf %138, %137 : vector<1x256xf32>
    %140 = arith.addf %136, %139 : vector<1x256xf32>
    %141 = vector.extract_strided_slice %91 {offsets = [2, 0], sizes = [1, 256], strides = [1, 1]} : vector<4x256xf32> to vector<1x256xf32>
    %142 = vector.broadcast %12 : f32 to vector<1x256xf32>
    %143 = arith.mulf %142, %141 : vector<1x256xf32>
    %144 = arith.addf %140, %143 : vector<1x256xf32>
    %145 = vector.extract_strided_slice %91 {offsets = [3, 0], sizes = [1, 256], strides = [1, 1]} : vector<4x256xf32> to vector<1x256xf32>
    %146 = vector.broadcast %16 : f32 to vector<1x256xf32>
    %147 = arith.mulf %146, %145 : vector<1x256xf32>
    %148 = arith.addf %144, %147 : vector<1x256xf32>
    %149 = vector.extract_strided_slice %1 {offsets = [3, 0], sizes = [1, 256], strides = [1, 1]} : vector<4x256xf32> to vector<1x256xf32>
    %150 = vector.extract_strided_slice %91 {offsets = [0, 0], sizes = [1, 256], strides = [1, 1]} : vector<4x256xf32> to vector<1x256xf32>
    %151 = vector.broadcast %5 : f32 to vector<1x256xf32>
    %152 = arith.mulf %151, %150 : vector<1x256xf32>
    %153 = arith.addf %149, %152 : vector<1x256xf32>
    %154 = vector.extract_strided_slice %91 {offsets = [1, 0], sizes = [1, 256], strides = [1, 1]} : vector<4x256xf32> to vector<1x256xf32>
    %155 = vector.broadcast %9 : f32 to vector<1x256xf32>
    %156 = arith.mulf %155, %154 : vector<1x256xf32>
    %157 = arith.addf %153, %156 : vector<1x256xf32>
    %158 = vector.extract_strided_slice %91 {offsets = [2, 0], sizes = [1, 256], strides = [1, 1]} : vector<4x256xf32> to vector<1x256xf32>
    %159 = vector.broadcast %13 : f32 to vector<1x256xf32>
    %160 = arith.mulf %159, %158 : vector<1x256xf32>
    %161 = arith.addf %157, %160 : vector<1x256xf32>
    %162 = vector.extract_strided_slice %91 {offsets = [3, 0], sizes = [1, 256], strides = [1, 1]} : vector<4x256xf32> to vector<1x256xf32>
    %163 = vector.broadcast %17 : f32 to vector<1x256xf32>
    %164 = arith.mulf %163, %162 : vector<1x256xf32>
    %165 = arith.addf %161, %164 : vector<1x256xf32>
    %166 = tpu.concatenate %114, %131, %148, %165 in 0 : vector<1x256xf32>, vector<1x256xf32>, vector<1x256xf32>, vector<1x256xf32> -> vector<4x256xf32>
    %167 = math.tanh %166 : vector<4x256xf32>
    %c1_44 = arith.constant 1 : index
    %c0_45 = arith.constant 0 : index
    %c0_46 = arith.constant 0 : index
    %168 = vector.load %arg4[%c1_44, %c0_45, %c0_46] : memref<5x4x256xf32, #tpu.memory_space<vmem>>, vector<1x4x256xf32>
    %169 = vector.shape_cast %168 : vector<1x4x256xf32> to vector<4x256xf32>
    %170 = vector.shape_cast %91 : vector<4x256xf32> to vector<1x4x256xf32>
    tpu.vector_store %arg4[%c1_44, %c0_45, %c0_46], %170 {strides = array<i32>} : memref<5x4x256xf32, #tpu.memory_space<vmem>>, vector<1x4x256xf32>,
    %c1_47 = arith.constant 1 : index
    %c0_48 = arith.constant 0 : index
    %c0_49 = arith.constant 0 : index
    %171 = vector.load %arg5[%c1_47, %c0_48, %c0_49] : memref<5x4x256xf32, #tpu.memory_space<vmem>>, vector<1x4x256xf32>
    %172 = vector.shape_cast %171 : vector<1x4x256xf32> to vector<4x256xf32>
    %173 = vector.shape_cast %167 : vector<4x256xf32> to vector<1x4x256xf32>
    tpu.vector_store %arg5[%c1_47, %c0_48, %c0_49], %173 {strides = array<i32>} : memref<5x4x256xf32, #tpu.memory_space<vmem>>, vector<1x4x256xf32>,
    %cst_50 = arith.constant 0x7F800000 : f32
    %false = arith.constant false
    %c2_i32 = arith.constant 2 : i32
    %c18_i32 = arith.constant 18 : i32
    %174 = arith.addi %c2_i32, %c18_i32 : i32
    %c1_i32 = arith.constant 1 : i32
    %175:3 = scf.for %arg6 = %c2_i32 to %174 step %c1_i32 iter_args(%arg7 = %1, %arg8 = %cst_50, %arg9 = %false) -> (vector<4x256xf32>, f32, i1)  : i32 {
      %c5_i32 = arith.constant 5 : i32
      %179 = arith.minsi %arg6, %c5_i32 : i32
      %c0_55 = arith.constant 0 : index
      %c0_56 = arith.constant 0 : index
      %c0_57 = arith.constant 0 : index
      %180 = vector.load %arg4[%c0_55, %c0_56, %c0_57] : memref<5x4x256xf32, #tpu.memory_space<vmem>>, vector<1x4x256xf32>
      %181 = vector.shape_cast %180 : vector<1x4x256xf32> to vector<4x256xf32>
      %c1_58 = arith.constant 1 : index
      %c0_59 = arith.constant 0 : index
      %c0_60 = arith.constant 0 : index
      %182 = vector.load %arg4[%c1_58, %c0_59, %c0_60] : memref<5x4x256xf32, #tpu.memory_space<vmem>>, vector<1x4x256xf32>
      %183 = vector.shape_cast %182 : vector<1x4x256xf32> to vector<4x256xf32>
      %c2_61 = arith.constant 2 : index
      %c0_62 = arith.constant 0 : index
      %c0_63 = arith.constant 0 : index
      %184 = vector.load %arg4[%c2_61, %c0_62, %c0_63] : memref<5x4x256xf32, #tpu.memory_space<vmem>>, vector<1x4x256xf32>
      %185 = vector.shape_cast %184 : vector<1x4x256xf32> to vector<4x256xf32>
      %c3_64 = arith.constant 3 : index
      %c0_65 = arith.constant 0 : index
      %c0_66 = arith.constant 0 : index
      %186 = vector.load %arg4[%c3_64, %c0_65, %c0_66] : memref<5x4x256xf32, #tpu.memory_space<vmem>>, vector<1x4x256xf32>
      %187 = vector.shape_cast %186 : vector<1x4x256xf32> to vector<4x256xf32>
      %c4 = arith.constant 4 : index
      %c0_67 = arith.constant 0 : index
      %c0_68 = arith.constant 0 : index
      %188 = vector.load %arg4[%c4, %c0_67, %c0_68] : memref<5x4x256xf32, #tpu.memory_space<vmem>>, vector<1x4x256xf32>
      %189 = vector.shape_cast %188 : vector<1x4x256xf32> to vector<4x256xf32>
      %c0_69 = arith.constant 0 : index
      %c0_70 = arith.constant 0 : index
      %c0_71 = arith.constant 0 : index
      %190 = vector.load %arg5[%c0_69, %c0_70, %c0_71] : memref<5x4x256xf32, #tpu.memory_space<vmem>>, vector<1x4x256xf32>
      %191 = vector.shape_cast %190 : vector<1x4x256xf32> to vector<4x256xf32>
      %c1_72 = arith.constant 1 : index
      %c0_73 = arith.constant 0 : index
      %c0_74 = arith.constant 0 : index
      %192 = vector.load %arg5[%c1_72, %c0_73, %c0_74] : memref<5x4x256xf32, #tpu.memory_space<vmem>>, vector<1x4x256xf32>
      %193 = vector.shape_cast %192 : vector<1x4x256xf32> to vector<4x256xf32>
      %c2_75 = arith.constant 2 : index
      %c0_76 = arith.constant 0 : index
      %c0_77 = arith.constant 0 : index
      %194 = vector.load %arg5[%c2_75, %c0_76, %c0_77] : memref<5x4x256xf32, #tpu.memory_space<vmem>>, vector<1x4x256xf32>
      %195 = vector.shape_cast %194 : vector<1x4x256xf32> to vector<4x256xf32>
      %c3_78 = arith.constant 3 : index
      %c0_79 = arith.constant 0 : index
      %c0_80 = arith.constant 0 : index
      %196 = vector.load %arg5[%c3_78, %c0_79, %c0_80] : memref<5x4x256xf32, #tpu.memory_space<vmem>>, vector<1x4x256xf32>
      %197 = vector.shape_cast %196 : vector<1x4x256xf32> to vector<4x256xf32>
      %c4_81 = arith.constant 4 : index
      %c0_82 = arith.constant 0 : index
      %c0_83 = arith.constant 0 : index
      %198 = vector.load %arg5[%c4_81, %c0_82, %c0_83] : memref<5x4x256xf32, #tpu.memory_space<vmem>>, vector<1x4x256xf32>
      %199 = vector.shape_cast %198 : vector<1x4x256xf32> to vector<4x256xf32>
      %200 = arith.subf %191, %181 : vector<4x256xf32>
      %201 = arith.subf %193, %183 : vector<4x256xf32>
      %202 = arith.subf %195, %185 : vector<4x256xf32>
      %203 = arith.subf %197, %187 : vector<4x256xf32>
      %204 = arith.subf %199, %189 : vector<4x256xf32>
      %c0_i32 = arith.constant 0 : i32
      %205 = arith.cmpi sgt, %179, %c0_i32 : i32
      %206 = arith.extui %205 : i1 to i32
      %207 = arith.sitofp %206 : i32 to f32
      %c1_i32_84 = arith.constant 1 : i32
      %208 = arith.cmpi sgt, %179, %c1_i32_84 : i32
      %209 = arith.extui %208 : i1 to i32
      %210 = arith.sitofp %209 : i32 to f32
      %c2_i32_85 = arith.constant 2 : i32
      %211 = arith.cmpi sgt, %179, %c2_i32_85 : i32
      %212 = arith.extui %211 : i1 to i32
      %213 = arith.sitofp %212 : i32 to f32
      %c3_i32 = arith.constant 3 : i32
      %214 = arith.cmpi sgt, %179, %c3_i32 : i32
      %215 = arith.extui %214 : i1 to i32
      %216 = arith.sitofp %215 : i32 to f32
      %c4_i32 = arith.constant 4 : i32
      %217 = arith.cmpi sgt, %179, %c4_i32 : i32
      %218 = arith.extui %217 : i1 to i32
      %219 = arith.sitofp %218 : i32 to f32
      %220 = arith.mulf %200, %200 : vector<4x256xf32>
      %221 = vector.shape_cast %220 : vector<4x256xf32> to vector<1x4x256xf32>
      %cst_86 = arith.constant dense<0.000000e+00> : vector<1xf32>
      %222 = vector.multi_reduction <add>, %221, %cst_86 [1, 2] : vector<1x4x256xf32> to vector<1xf32>
      %223 = vector.shape_cast %222 : vector<1xf32> to vector<1x1x1xf32>
      %224 = vector.extract %223[0, 0, 0] : f32 from vector<1x1x1xf32>
      %225 = arith.mulf %200, %201 : vector<4x256xf32>
      %226 = vector.shape_cast %225 : vector<4x256xf32> to vector<1x4x256xf32>
      %cst_87 = arith.constant dense<0.000000e+00> : vector<1xf32>
      %227 = vector.multi_reduction <add>, %226, %cst_87 [1, 2] : vector<1x4x256xf32> to vector<1xf32>
      %228 = vector.shape_cast %227 : vector<1xf32> to vector<1x1x1xf32>
      %229 = vector.extract %228[0, 0, 0] : f32 from vector<1x1x1xf32>
      %230 = arith.mulf %200, %202 : vector<4x256xf32>
      %231 = vector.shape_cast %230 : vector<4x256xf32> to vector<1x4x256xf32>
      %cst_88 = arith.constant dense<0.000000e+00> : vector<1xf32>
      %232 = vector.multi_reduction <add>, %231, %cst_88 [1, 2] : vector<1x4x256xf32> to vector<1xf32>
      %233 = vector.shape_cast %232 : vector<1xf32> to vector<1x1x1xf32>
      %234 = vector.extract %233[0, 0, 0] : f32 from vector<1x1x1xf32>
      %235 = arith.mulf %200, %203 : vector<4x256xf32>
      %236 = vector.shape_cast %235 : vector<4x256xf32> to vector<1x4x256xf32>
      %cst_89 = arith.constant dense<0.000000e+00> : vector<1xf32>
      %237 = vector.multi_reduction <add>, %236, %cst_89 [1, 2] : vector<1x4x256xf32> to vector<1xf32>
      %238 = vector.shape_cast %237 : vector<1xf32> to vector<1x1x1xf32>
      %239 = vector.extract %238[0, 0, 0] : f32 from vector<1x1x1xf32>
      %240 = arith.mulf %200, %204 : vector<4x256xf32>
      %241 = vector.shape_cast %240 : vector<4x256xf32> to vector<1x4x256xf32>
      %cst_90 = arith.constant dense<0.000000e+00> : vector<1xf32>
      %242 = vector.multi_reduction <add>, %241, %cst_90 [1, 2] : vector<1x4x256xf32> to vector<1xf32>
      %243 = vector.shape_cast %242 : vector<1xf32> to vector<1x1x1xf32>
      %244 = vector.extract %243[0, 0, 0] : f32 from vector<1x1x1xf32>
      %245 = arith.mulf %201, %201 : vector<4x256xf32>
      %246 = vector.shape_cast %245 : vector<4x256xf32> to vector<1x4x256xf32>
      %cst_91 = arith.constant dense<0.000000e+00> : vector<1xf32>
      %247 = vector.multi_reduction <add>, %246, %cst_91 [1, 2] : vector<1x4x256xf32> to vector<1xf32>
      %248 = vector.shape_cast %247 : vector<1xf32> to vector<1x1x1xf32>
      %249 = vector.extract %248[0, 0, 0] : f32 from vector<1x1x1xf32>
      %250 = arith.mulf %201, %202 : vector<4x256xf32>
      %251 = vector.shape_cast %250 : vector<4x256xf32> to vector<1x4x256xf32>
      %cst_92 = arith.constant dense<0.000000e+00> : vector<1xf32>
      %252 = vector.multi_reduction <add>, %251, %cst_92 [1, 2] : vector<1x4x256xf32> to vector<1xf32>
      %253 = vector.shape_cast %252 : vector<1xf32> to vector<1x1x1xf32>
      %254 = vector.extract %253[0, 0, 0] : f32 from vector<1x1x1xf32>
      %255 = arith.mulf %201, %203 : vector<4x256xf32>
      %256 = vector.shape_cast %255 : vector<4x256xf32> to vector<1x4x256xf32>
      %cst_93 = arith.constant dense<0.000000e+00> : vector<1xf32>
      %257 = vector.multi_reduction <add>, %256, %cst_93 [1, 2] : vector<1x4x256xf32> to vector<1xf32>
      %258 = vector.shape_cast %257 : vector<1xf32> to vector<1x1x1xf32>
      %259 = vector.extract %258[0, 0, 0] : f32 from vector<1x1x1xf32>
      %260 = arith.mulf %201, %204 : vector<4x256xf32>
      %261 = vector.shape_cast %260 : vector<4x256xf32> to vector<1x4x256xf32>
      %cst_94 = arith.constant dense<0.000000e+00> : vector<1xf32>
      %262 = vector.multi_reduction <add>, %261, %cst_94 [1, 2] : vector<1x4x256xf32> to vector<1xf32>
      %263 = vector.shape_cast %262 : vector<1xf32> to vector<1x1x1xf32>
      %264 = vector.extract %263[0, 0, 0] : f32 from vector<1x1x1xf32>
      %265 = arith.mulf %202, %202 : vector<4x256xf32>
      %266 = vector.shape_cast %265 : vector<4x256xf32> to vector<1x4x256xf32>
      %cst_95 = arith.constant dense<0.000000e+00> : vector<1xf32>
      %267 = vector.multi_reduction <add>, %266, %cst_95 [1, 2] : vector<1x4x256xf32> to vector<1xf32>
      %268 = vector.shape_cast %267 : vector<1xf32> to vector<1x1x1xf32>
      %269 = vector.extract %268[0, 0, 0] : f32 from vector<1x1x1xf32>
      %270 = arith.mulf %202, %203 : vector<4x256xf32>
      %271 = vector.shape_cast %270 : vector<4x256xf32> to vector<1x4x256xf32>
      %cst_96 = arith.constant dense<0.000000e+00> : vector<1xf32>
      %272 = vector.multi_reduction <add>, %271, %cst_96 [1, 2] : vector<1x4x256xf32> to vector<1xf32>
      %273 = vector.shape_cast %272 : vector<1xf32> to vector<1x1x1xf32>
      %274 = vector.extract %273[0, 0, 0] : f32 from vector<1x1x1xf32>
      %275 = arith.mulf %202, %204 : vector<4x256xf32>
      %276 = vector.shape_cast %275 : vector<4x256xf32> to vector<1x4x256xf32>
      %cst_97 = arith.constant dense<0.000000e+00> : vector<1xf32>
      %277 = vector.multi_reduction <add>, %276, %cst_97 [1, 2] : vector<1x4x256xf32> to vector<1xf32>
      %278 = vector.shape_cast %277 : vector<1xf32> to vector<1x1x1xf32>
      %279 = vector.extract %278[0, 0, 0] : f32 from vector<1x1x1xf32>
      %280 = arith.mulf %203, %203 : vector<4x256xf32>
      %281 = vector.shape_cast %280 : vector<4x256xf32> to vector<1x4x256xf32>
      %cst_98 = arith.constant dense<0.000000e+00> : vector<1xf32>
      %282 = vector.multi_reduction <add>, %281, %cst_98 [1, 2] : vector<1x4x256xf32> to vector<1xf32>
      %283 = vector.shape_cast %282 : vector<1xf32> to vector<1x1x1xf32>
      %284 = vector.extract %283[0, 0, 0] : f32 from vector<1x1x1xf32>
      %285 = arith.mulf %203, %204 : vector<4x256xf32>
      %286 = vector.shape_cast %285 : vector<4x256xf32> to vector<1x4x256xf32>
      %cst_99 = arith.constant dense<0.000000e+00> : vector<1xf32>
      %287 = vector.multi_reduction <add>, %286, %cst_99 [1, 2] : vector<1x4x256xf32> to vector<1xf32>
      %288 = vector.shape_cast %287 : vector<1xf32> to vector<1x1x1xf32>
      %289 = vector.extract %288[0, 0, 0] : f32 from vector<1x1x1xf32>
      %290 = arith.mulf %204, %204 : vector<4x256xf32>
      %291 = vector.shape_cast %290 : vector<4x256xf32> to vector<1x4x256xf32>
      %cst_100 = arith.constant dense<0.000000e+00> : vector<1xf32>
      %292 = vector.multi_reduction <add>, %291, %cst_100 [1, 2] : vector<1x4x256xf32> to vector<1xf32>
      %293 = vector.shape_cast %292 : vector<1xf32> to vector<1x1x1xf32>
      %294 = vector.extract %293[0, 0, 0] : f32 from vector<1x1x1xf32>
      %295 = arith.mulf %224, %207 : f32
      %296 = arith.mulf %295, %207 : f32
      %cst_101 = arith.constant 9.99999974E-5 : f32
      %297 = arith.mulf %cst_101, %207 : f32
      %cst_102 = arith.constant 1.000000e+00 : f32
      %298 = arith.subf %cst_102, %207 : f32
      %299 = arith.addf %297, %298 : f32
      %300 = arith.addf %296, %299 : f32
      %301 = arith.mulf %229, %207 : f32
      %302 = arith.mulf %301, %210 : f32
      %cst_103 = arith.constant 0.000000e+00 : f32
      %303 = arith.addf %302, %cst_103 : f32
      %304 = arith.mulf %234, %207 : f32
      %305 = arith.mulf %304, %213 : f32
      %cst_104 = arith.constant 0.000000e+00 : f32
      %306 = arith.addf %305, %cst_104 : f32
      %307 = arith.mulf %239, %207 : f32
      %308 = arith.mulf %307, %216 : f32
      %cst_105 = arith.constant 0.000000e+00 : f32
      %309 = arith.addf %308, %cst_105 : f32
      %310 = arith.mulf %244, %207 : f32
      %311 = arith.mulf %310, %219 : f32
      %cst_106 = arith.constant 0.000000e+00 : f32
      %312 = arith.addf %311, %cst_106 : f32
      %313 = arith.mulf %229, %210 : f32
      %314 = arith.mulf %313, %207 : f32
      %cst_107 = arith.constant 0.000000e+00 : f32
      %315 = arith.addf %314, %cst_107 : f32
      %316 = arith.mulf %249, %210 : f32
      %317 = arith.mulf %316, %210 : f32
      %cst_108 = arith.constant 9.99999974E-5 : f32
      %318 = arith.mulf %cst_108, %210 : f32
      %cst_109 = arith.constant 1.000000e+00 : f32
      %319 = arith.subf %cst_109, %210 : f32
      %320 = arith.addf %318, %319 : f32
      %321 = arith.addf %317, %320 : f32
      %322 = arith.mulf %254, %210 : f32
      %323 = arith.mulf %322, %213 : f32
      %cst_110 = arith.constant 0.000000e+00 : f32
      %324 = arith.addf %323, %cst_110 : f32
      %325 = arith.mulf %259, %210 : f32
      %326 = arith.mulf %325, %216 : f32
      %cst_111 = arith.constant 0.000000e+00 : f32
      %327 = arith.addf %326, %cst_111 : f32
      %328 = arith.mulf %264, %210 : f32
      %329 = arith.mulf %328, %219 : f32
      %cst_112 = arith.constant 0.000000e+00 : f32
      %330 = arith.addf %329, %cst_112 : f32
      %331 = arith.mulf %234, %213 : f32
      %332 = arith.mulf %331, %207 : f32
      %cst_113 = arith.constant 0.000000e+00 : f32
      %333 = arith.addf %332, %cst_113 : f32
      %334 = arith.mulf %254, %213 : f32
      %335 = arith.mulf %334, %210 : f32
      %cst_114 = arith.constant 0.000000e+00 : f32
      %336 = arith.addf %335, %cst_114 : f32
      %337 = arith.mulf %269, %213 : f32
      %338 = arith.mulf %337, %213 : f32
      %cst_115 = arith.constant 9.99999974E-5 : f32
      %339 = arith.mulf %cst_115, %213 : f32
      %cst_116 = arith.constant 1.000000e+00 : f32
      %340 = arith.subf %cst_116, %213 : f32
      %341 = arith.addf %339, %340 : f32
      %342 = arith.addf %338, %341 : f32
      %343 = arith.mulf %274, %213 : f32
      %344 = arith.mulf %343, %216 : f32
      %cst_117 = arith.constant 0.000000e+00 : f32
      %345 = arith.addf %344, %cst_117 : f32
      %346 = arith.mulf %279, %213 : f32
      %347 = arith.mulf %346, %219 : f32
      %cst_118 = arith.constant 0.000000e+00 : f32
      %348 = arith.addf %347, %cst_118 : f32
      %349 = arith.mulf %239, %216 : f32
      %350 = arith.mulf %349, %207 : f32
      %cst_119 = arith.constant 0.000000e+00 : f32
      %351 = arith.addf %350, %cst_119 : f32
      %352 = arith.mulf %259, %216 : f32
      %353 = arith.mulf %352, %210 : f32
      %cst_120 = arith.constant 0.000000e+00 : f32
      %354 = arith.addf %353, %cst_120 : f32
      %355 = arith.mulf %274, %216 : f32
      %356 = arith.mulf %355, %213 : f32
      %cst_121 = arith.constant 0.000000e+00 : f32
      %357 = arith.addf %356, %cst_121 : f32
      %358 = arith.mulf %284, %216 : f32
      %359 = arith.mulf %358, %216 : f32
      %cst_122 = arith.constant 9.99999974E-5 : f32
      %360 = arith.mulf %cst_122, %216 : f32
      %cst_123 = arith.constant 1.000000e+00 : f32
      %361 = arith.subf %cst_123, %216 : f32
      %362 = arith.addf %360, %361 : f32
      %363 = arith.addf %359, %362 : f32
      %364 = arith.mulf %289, %216 : f32
      %365 = arith.mulf %364, %219 : f32
      %cst_124 = arith.constant 0.000000e+00 : f32
      %366 = arith.addf %365, %cst_124 : f32
      %367 = arith.mulf %244, %219 : f32
      %368 = arith.mulf %367, %207 : f32
      %cst_125 = arith.constant 0.000000e+00 : f32
      %369 = arith.addf %368, %cst_125 : f32
      %370 = arith.mulf %264, %219 : f32
      %371 = arith.mulf %370, %210 : f32
      %cst_126 = arith.constant 0.000000e+00 : f32
      %372 = arith.addf %371, %cst_126 : f32
      %373 = arith.mulf %279, %219 : f32
      %374 = arith.mulf %373, %213 : f32
      %cst_127 = arith.constant 0.000000e+00 : f32
      %375 = arith.addf %374, %cst_127 : f32
      %376 = arith.mulf %289, %219 : f32
      %377 = arith.mulf %376, %216 : f32
      %cst_128 = arith.constant 0.000000e+00 : f32
      %378 = arith.addf %377, %cst_128 : f32
      %379 = arith.mulf %294, %219 : f32
      %380 = arith.mulf %379, %219 : f32
      %cst_129 = arith.constant 9.99999974E-5 : f32
      %381 = arith.mulf %cst_129, %219 : f32
      %cst_130 = arith.constant 1.000000e+00 : f32
      %382 = arith.subf %cst_130, %219 : f32
      %383 = arith.addf %381, %382 : f32
      %384 = arith.addf %380, %383 : f32
      %cst_131 = arith.constant 1.000000e+00 : f32
      %385 = arith.divf %cst_131, %300 : f32
      %386 = arith.mulf %315, %385 : f32
      %387 = arith.mulf %386, %303 : f32
      %388 = arith.subf %321, %387 : f32
      %389 = arith.mulf %386, %306 : f32
      %390 = arith.subf %324, %389 : f32
      %391 = arith.mulf %386, %309 : f32
      %392 = arith.subf %327, %391 : f32
      %393 = arith.mulf %386, %312 : f32
      %394 = arith.subf %330, %393 : f32
      %395 = arith.mulf %386, %207 : f32
      %396 = arith.subf %210, %395 : f32
      %397 = arith.mulf %333, %385 : f32
      %398 = arith.mulf %397, %303 : f32
      %399 = arith.subf %336, %398 : f32
      %400 = arith.mulf %397, %306 : f32
      %401 = arith.subf %342, %400 : f32
      %402 = arith.mulf %397, %309 : f32
      %403 = arith.subf %345, %402 : f32
      %404 = arith.mulf %397, %312 : f32
      %405 = arith.subf %348, %404 : f32
      %406 = arith.mulf %397, %207 : f32
      %407 = arith.subf %213, %406 : f32
      %408 = arith.mulf %351, %385 : f32
      %409 = arith.mulf %408, %303 : f32
      %410 = arith.subf %354, %409 : f32
      %411 = arith.mulf %408, %306 : f32
      %412 = arith.subf %357, %411 : f32
      %413 = arith.mulf %408, %309 : f32
      %414 = arith.subf %363, %413 : f32
      %415 = arith.mulf %408, %312 : f32
      %416 = arith.subf %366, %415 : f32
      %417 = arith.mulf %408, %207 : f32
      %418 = arith.subf %216, %417 : f32
      %419 = arith.mulf %369, %385 : f32
      %420 = arith.mulf %419, %303 : f32
      %421 = arith.subf %372, %420 : f32
      %422 = arith.mulf %419, %306 : f32
      %423 = arith.subf %375, %422 : f32
      %424 = arith.mulf %419, %309 : f32
      %425 = arith.subf %378, %424 : f32
      %426 = arith.mulf %419, %312 : f32
      %427 = arith.subf %384, %426 : f32
      %428 = arith.mulf %419, %207 : f32
      %429 = arith.subf %219, %428 : f32
      %cst_132 = arith.constant 1.000000e+00 : f32
      %430 = arith.divf %cst_132, %388 : f32
      %431 = arith.mulf %303, %430 : f32
      %432 = arith.mulf %431, %390 : f32
      %433 = arith.subf %306, %432 : f32
      %434 = arith.mulf %431, %392 : f32
      %435 = arith.subf %309, %434 : f32
      %436 = arith.mulf %431, %394 : f32
      %437 = arith.subf %312, %436 : f32
      %438 = arith.mulf %431, %396 : f32
      %439 = arith.subf %207, %438 : f32
      %440 = arith.mulf %399, %430 : f32
      %441 = arith.mulf %440, %390 : f32
      %442 = arith.subf %401, %441 : f32
      %443 = arith.mulf %440, %392 : f32
      %444 = arith.subf %403, %443 : f32
      %445 = arith.mulf %440, %394 : f32
      %446 = arith.subf %405, %445 : f32
      %447 = arith.mulf %440, %396 : f32
      %448 = arith.subf %407, %447 : f32
      %449 = arith.mulf %410, %430 : f32
      %450 = arith.mulf %449, %390 : f32
      %451 = arith.subf %412, %450 : f32
      %452 = arith.mulf %449, %392 : f32
      %453 = arith.subf %414, %452 : f32
      %454 = arith.mulf %449, %394 : f32
      %455 = arith.subf %416, %454 : f32
      %456 = arith.mulf %449, %396 : f32
      %457 = arith.subf %418, %456 : f32
      %458 = arith.mulf %421, %430 : f32
      %459 = arith.mulf %458, %390 : f32
      %460 = arith.subf %423, %459 : f32
      %461 = arith.mulf %458, %392 : f32
      %462 = arith.subf %425, %461 : f32
      %463 = arith.mulf %458, %394 : f32
      %464 = arith.subf %427, %463 : f32
      %465 = arith.mulf %458, %396 : f32
      %466 = arith.subf %429, %465 : f32
      %cst_133 = arith.constant 1.000000e+00 : f32
      %467 = arith.divf %cst_133, %442 : f32
      %468 = arith.mulf %433, %467 : f32
      %469 = arith.mulf %468, %444 : f32
      %470 = arith.subf %435, %469 : f32
      %471 = arith.mulf %468, %446 : f32
      %472 = arith.subf %437, %471 : f32
      %473 = arith.mulf %468, %448 : f32
      %474 = arith.subf %439, %473 : f32
      %475 = arith.mulf %390, %467 : f32
      %476 = arith.mulf %475, %444 : f32
      %477 = arith.subf %392, %476 : f32
      %478 = arith.mulf %475, %446 : f32
      %479 = arith.subf %394, %478 : f32
      %480 = arith.mulf %475, %448 : f32
      %481 = arith.subf %396, %480 : f32
      %482 = arith.mulf %451, %467 : f32
      %483 = arith.mulf %482, %444 : f32
      %484 = arith.subf %453, %483 : f32
      %485 = arith.mulf %482, %446 : f32
      %486 = arith.subf %455, %485 : f32
      %487 = arith.mulf %482, %448 : f32
      %488 = arith.subf %457, %487 : f32
      %489 = arith.mulf %460, %467 : f32
      %490 = arith.mulf %489, %444 : f32
      %491 = arith.subf %462, %490 : f32
      %492 = arith.mulf %489, %446 : f32
      %493 = arith.subf %464, %492 : f32
      %494 = arith.mulf %489, %448 : f32
      %495 = arith.subf %466, %494 : f32
      %cst_134 = arith.constant 1.000000e+00 : f32
      %496 = arith.divf %cst_134, %484 : f32
      %497 = arith.mulf %470, %496 : f32
      %498 = arith.mulf %497, %486 : f32
      %499 = arith.subf %472, %498 : f32
      %500 = arith.mulf %497, %488 : f32
      %501 = arith.subf %474, %500 : f32
      %502 = arith.mulf %477, %496 : f32
      %503 = arith.mulf %502, %486 : f32
      %504 = arith.subf %479, %503 : f32
      %505 = arith.mulf %502, %488 : f32
      %506 = arith.subf %481, %505 : f32
      %507 = arith.mulf %444, %496 : f32
      %508 = arith.mulf %507, %486 : f32
      %509 = arith.subf %446, %508 : f32
      %510 = arith.mulf %507, %488 : f32
      %511 = arith.subf %448, %510 : f32
      %512 = arith.mulf %491, %496 : f32
      %513 = arith.mulf %512, %486 : f32
      %514 = arith.subf %493, %513 : f32
      %515 = arith.mulf %512, %488 : f32
      %516 = arith.subf %495, %515 : f32
      %cst_135 = arith.constant 1.000000e+00 : f32
      %517 = arith.divf %cst_135, %514 : f32
      %518 = arith.mulf %499, %517 : f32
      %519 = arith.mulf %518, %516 : f32
      %520 = arith.subf %501, %519 : f32
      %521 = arith.mulf %504, %517 : f32
      %522 = arith.mulf %521, %516 : f32
      %523 = arith.subf %506, %522 : f32
      %524 = arith.mulf %509, %517 : f32
      %525 = arith.mulf %524, %516 : f32
      %526 = arith.subf %511, %525 : f32
      %527 = arith.mulf %486, %517 : f32
      %528 = arith.mulf %527, %516 : f32
      %529 = arith.subf %488, %528 : f32
      %530 = arith.divf %520, %300 : f32
      %531 = arith.divf %523, %388 : f32
      %532 = arith.divf %526, %442 : f32
      %533 = arith.divf %529, %484 : f32
      %534 = arith.divf %516, %514 : f32
      %535 = arith.addf %530, %531 : f32
      %536 = arith.addf %535, %532 : f32
      %537 = arith.addf %536, %533 : f32
      %538 = arith.addf %537, %534 : f32
      %cst_136 = arith.constant 1.000000e+00 : f32
      %539 = arith.divf %cst_136, %538 : f32
      %540 = arith.mulf %530, %539 : f32
      %541 = arith.mulf %531, %539 : f32
      %542 = arith.mulf %532, %539 : f32
      %543 = arith.mulf %533, %539 : f32
      %544 = arith.mulf %534, %539 : f32
      %545 = vector.broadcast %540 : f32 to vector<4x256xf32>
      %546 = arith.mulf %545, %191 : vector<4x256xf32>
      %547 = vector.broadcast %541 : f32 to vector<4x256xf32>
      %548 = arith.mulf %547, %193 : vector<4x256xf32>
      %549 = arith.addf %546, %548 : vector<4x256xf32>
      %550 = vector.broadcast %542 : f32 to vector<4x256xf32>
      %551 = arith.mulf %550, %195 : vector<4x256xf32>
      %552 = arith.addf %549, %551 : vector<4x256xf32>
      %553 = vector.broadcast %543 : f32 to vector<4x256xf32>
      %554 = arith.mulf %553, %197 : vector<4x256xf32>
      %555 = arith.addf %552, %554 : vector<4x256xf32>
      %556 = vector.broadcast %544 : f32 to vector<4x256xf32>
      %557 = arith.mulf %556, %199 : vector<4x256xf32>
      %558 = arith.addf %555, %557 : vector<4x256xf32>
      %559 = vector.extract_strided_slice %1 {offsets = [0, 0], sizes = [1, 256], strides = [1, 1]} : vector<4x256xf32> to vector<1x256xf32>
      %560 = vector.extract_strided_slice %558 {offsets = [0, 0], sizes = [1, 256], strides = [1, 1]} : vector<4x256xf32> to vector<1x256xf32>
      %561 = vector.broadcast %2 : f32 to vector<1x256xf32>
      %562 = arith.mulf %561, %560 : vector<1x256xf32>
      %563 = arith.addf %559, %562 : vector<1x256xf32>
      %564 = vector.extract_strided_slice %558 {offsets = [1, 0], sizes = [1, 256], strides = [1, 1]} : vector<4x256xf32> to vector<1x256xf32>
      %565 = vector.broadcast %6 : f32 to vector<1x256xf32>
      %566 = arith.mulf %565, %564 : vector<1x256xf32>
      %567 = arith.addf %563, %566 : vector<1x256xf32>
      %568 = vector.extract_strided_slice %558 {offsets = [2, 0], sizes = [1, 256], strides = [1, 1]} : vector<4x256xf32> to vector<1x256xf32>
      %569 = vector.broadcast %10 : f32 to vector<1x256xf32>
      %570 = arith.mulf %569, %568 : vector<1x256xf32>
      %571 = arith.addf %567, %570 : vector<1x256xf32>
      %572 = vector.extract_strided_slice %558 {offsets = [3, 0], sizes = [1, 256], strides = [1, 1]} : vector<4x256xf32> to vector<1x256xf32>
      %573 = vector.broadcast %14 : f32 to vector<1x256xf32>
      %574 = arith.mulf %573, %572 : vector<1x256xf32>
      %575 = arith.addf %571, %574 : vector<1x256xf32>
      %576 = vector.extract_strided_slice %1 {offsets = [1, 0], sizes = [1, 256], strides = [1, 1]} : vector<4x256xf32> to vector<1x256xf32>
      %577 = vector.extract_strided_slice %558 {offsets = [0, 0], sizes = [1, 256], strides = [1, 1]} : vector<4x256xf32> to vector<1x256xf32>
      %578 = vector.broadcast %3 : f32 to vector<1x256xf32>
      %579 = arith.mulf %578, %577 : vector<1x256xf32>
      %580 = arith.addf %576, %579 : vector<1x256xf32>
      %581 = vector.extract_strided_slice %558 {offsets = [1, 0], sizes = [1, 256], strides = [1, 1]} : vector<4x256xf32> to vector<1x256xf32>
      %582 = vector.broadcast %7 : f32 to vector<1x256xf32>
      %583 = arith.mulf %582, %581 : vector<1x256xf32>
      %584 = arith.addf %580, %583 : vector<1x256xf32>
      %585 = vector.extract_strided_slice %558 {offsets = [2, 0], sizes = [1, 256], strides = [1, 1]} : vector<4x256xf32> to vector<1x256xf32>
      %586 = vector.broadcast %11 : f32 to vector<1x256xf32>
      %587 = arith.mulf %586, %585 : vector<1x256xf32>
      %588 = arith.addf %584, %587 : vector<1x256xf32>
      %589 = vector.extract_strided_slice %558 {offsets = [3, 0], sizes = [1, 256], strides = [1, 1]} : vector<4x256xf32> to vector<1x256xf32>
      %590 = vector.broadcast %15 : f32 to vector<1x256xf32>
      %591 = arith.mulf %590, %589 : vector<1x256xf32>
      %592 = arith.addf %588, %591 : vector<1x256xf32>
      %593 = vector.extract_strided_slice %1 {offsets = [2, 0], sizes = [1, 256], strides = [1, 1]} : vector<4x256xf32> to vector<1x256xf32>
      %594 = vector.extract_strided_slice %558 {offsets = [0, 0], sizes = [1, 256], strides = [1, 1]} : vector<4x256xf32> to vector<1x256xf32>
      %595 = vector.broadcast %4 : f32 to vector<1x256xf32>
      %596 = arith.mulf %595, %594 : vector<1x256xf32>
      %597 = arith.addf %593, %596 : vector<1x256xf32>
      %598 = vector.extract_strided_slice %558 {offsets = [1, 0], sizes = [1, 256], strides = [1, 1]} : vector<4x256xf32> to vector<1x256xf32>
      %599 = vector.broadcast %8 : f32 to vector<1x256xf32>
      %600 = arith.mulf %599, %598 : vector<1x256xf32>
      %601 = arith.addf %597, %600 : vector<1x256xf32>
      %602 = vector.extract_strided_slice %558 {offsets = [2, 0], sizes = [1, 256], strides = [1, 1]} : vector<4x256xf32> to vector<1x256xf32>
      %603 = vector.broadcast %12 : f32 to vector<1x256xf32>
      %604 = arith.mulf %603, %602 : vector<1x256xf32>
      %605 = arith.addf %601, %604 : vector<1x256xf32>
      %606 = vector.extract_strided_slice %558 {offsets = [3, 0], sizes = [1, 256], strides = [1, 1]} : vector<4x256xf32> to vector<1x256xf32>
      %607 = vector.broadcast %16 : f32 to vector<1x256xf32>
      %608 = arith.mulf %607, %606 : vector<1x256xf32>
      %609 = arith.addf %605, %608 : vector<1x256xf32>
      %610 = vector.extract_strided_slice %1 {offsets = [3, 0], sizes = [1, 256], strides = [1, 1]} : vector<4x256xf32> to vector<1x256xf32>
      %611 = vector.extract_strided_slice %558 {offsets = [0, 0], sizes = [1, 256], strides = [1, 1]} : vector<4x256xf32> to vector<1x256xf32>
      %612 = vector.broadcast %5 : f32 to vector<1x256xf32>
      %613 = arith.mulf %612, %611 : vector<1x256xf32>
      %614 = arith.addf %610, %613 : vector<1x256xf32>
      %615 = vector.extract_strided_slice %558 {offsets = [1, 0], sizes = [1, 256], strides = [1, 1]} : vector<4x256xf32> to vector<1x256xf32>
      %616 = vector.broadcast %9 : f32 to vector<1x256xf32>
      %617 = arith.mulf %616, %615 : vector<1x256xf32>
      %618 = arith.addf %614, %617 : vector<1x256xf32>
      %619 = vector.extract_strided_slice %558 {offsets = [2, 0], sizes = [1, 256], strides = [1, 1]} : vector<4x256xf32> to vector<1x256xf32>
      %620 = vector.broadcast %13 : f32 to vector<1x256xf32>
      %621 = arith.mulf %620, %619 : vector<1x256xf32>
      %622 = arith.addf %618, %621 : vector<1x256xf32>
      %623 = vector.extract_strided_slice %558 {offsets = [3, 0], sizes = [1, 256], strides = [1, 1]} : vector<4x256xf32> to vector<1x256xf32>
      %624 = vector.broadcast %17 : f32 to vector<1x256xf32>
      %625 = arith.mulf %624, %623 : vector<1x256xf32>
      %626 = arith.addf %622, %625 : vector<1x256xf32>
      %627 = tpu.concatenate %575, %592, %609, %626 in 0 : vector<1x256xf32>, vector<1x256xf32>, vector<1x256xf32>, vector<1x256xf32> -> vector<4x256xf32>
      %628 = math.tanh %627 : vector<4x256xf32>
      %c5_i32_137 = arith.constant 5 : i32
      %c0_i32_138 = arith.constant 0 : i32
      %629 = arith.cmpi eq, %c5_i32_137, %c0_i32_138 : i32
      %c1_i32_139 = arith.constant 1 : i32
      %630 = arith.select %629, %c1_i32_139, %c5_i32_137 : i32
      %631 = arith.remsi %arg6, %630 : i32
      %c0_i32_140 = arith.constant 0 : i32
      %632 = arith.cmpi ne, %631, %c0_i32_140 : i32
      %c0_i32_141 = arith.constant 0 : i32
      %633 = arith.cmpi slt, %631, %c0_i32_141 : i32
      %c0_i32_142 = arith.constant 0 : i32
      %634 = arith.cmpi slt, %630, %c0_i32_142 : i32
      %635 = arith.xori %633, %634 : i1
      %636 = arith.andi %635, %632 : i1
      %637 = arith.addi %631, %630 : i32
      %638 = arith.select %636, %637, %631 : i32
      %639 = arith.index_cast %638 : i32 to index
      %c0_143 = arith.constant 0 : index
      %c0_144 = arith.constant 0 : index
      %640 = vector.load %arg4[%639, %c0_143, %c0_144] : memref<5x4x256xf32, #tpu.memory_space<vmem>>, vector<1x4x256xf32>
      %641 = vector.shape_cast %640 : vector<1x4x256xf32> to vector<4x256xf32>
      %642 = vector.shape_cast %558 : vector<4x256xf32> to vector<1x4x256xf32>
      tpu.vector_store %arg4[%639, %c0_143, %c0_144], %642 {strides = array<i32>} : memref<5x4x256xf32, #tpu.memory_space<vmem>>, vector<1x4x256xf32>,
      %643 = arith.index_cast %638 : i32 to index
      %c0_145 = arith.constant 0 : index
      %c0_146 = arith.constant 0 : index
      %644 = vector.load %arg5[%643, %c0_145, %c0_146] : memref<5x4x256xf32, #tpu.memory_space<vmem>>, vector<1x4x256xf32>
      %645 = vector.shape_cast %644 : vector<1x4x256xf32> to vector<4x256xf32>
      %646 = vector.shape_cast %628 : vector<4x256xf32> to vector<1x4x256xf32>
      tpu.vector_store %arg5[%643, %c0_145, %c0_146], %646 {strides = array<i32>} : memref<5x4x256xf32, #tpu.memory_space<vmem>>, vector<1x4x256xf32>,
      %647 = arith.subf %628, %558 : vector<4x256xf32>
      %648 = arith.mulf %647, %647 : vector<4x256xf32>
      %649 = vector.shape_cast %648 : vector<4x256xf32> to vector<1x4x256xf32>
      %cst_147 = arith.constant dense<0.000000e+00> : vector<1xf32>
      %650 = vector.multi_reduction <add>, %649, %cst_147 [1, 2] : vector<1x4x256xf32> to vector<1xf32>
      %651 = vector.shape_cast %650 : vector<1xf32> to vector<1x1x1xf32>
      %652 = vector.extract %651[0, 0, 0] : f32 from vector<1x1x1xf32>
      %653 = math.sqrt %652 : f32
      %654 = arith.mulf %628, %628 : vector<4x256xf32>
      %655 = vector.shape_cast %654 : vector<4x256xf32> to vector<1x4x256xf32>
      %cst_148 = arith.constant dense<0.000000e+00> : vector<1xf32>
      %656 = vector.multi_reduction <add>, %655, %cst_148 [1, 2] : vector<1x4x256xf32> to vector<1xf32>
      %657 = vector.shape_cast %656 : vector<1xf32> to vector<1x1x1xf32>
      %658 = vector.extract %657[0, 0, 0] : f32 from vector<1x1x1xf32>
      %659 = math.sqrt %658 : f32
      %cst_149 = arith.constant 9.99999974E-6 : f32
      %660 = arith.addf %cst_149, %659 : f32
      %661 = arith.divf %653, %660 : f32
      %true = arith.constant true
      %662 = arith.xori %arg9, %true : i1
      %663 = arith.cmpf olt, %661, %arg8 : f32
      %664 = arith.andi %662, %663 : i1
      %665 = arith.select %664, %558, %arg7 : vector<4x256xf32>
      %666 = arith.select %664, %661, %arg8 : f32
      %cst_150 = arith.constant 1.000000e-03 : f32
      %667 = arith.cmpf olt, %661, %cst_150 : f32
      %668 = arith.ori %arg9, %667 : i1
      scf.yield %665, %666, %668 : vector<4x256xf32>, f32, i1
    }
    %c18_i32_51 = arith.constant 18 : i32
    %c0_52 = arith.constant 0 : index
    %c0_53 = arith.constant 0 : index
    %c0_54 = arith.constant 0 : index
    %176 = vector.load %arg3[%c0_52, %c0_53, %c0_54] : memref<1x4x256xf32, #tpu.memory_space<vmem>>, vector<1x4x256xf32>
    %177 = vector.shape_cast %176 : vector<1x4x256xf32> to vector<4x256xf32>
    %178 = vector.shape_cast %175#0 : vector<4x256xf32> to vector<1x4x256xf32>
    tpu.vector_store %arg3[%c0_52, %c0_53, %c0_54], %178 {strides = array<i32>} : memref<1x4x256xf32, #tpu.memory_space<vmem>>, vector<1x4x256xf32>,
    return
  }
  func.func @transform_0(%arg0: i32) -> (i32, i32, i32) {
    %c0_i32 = arith.constant 0 : i32
    %c0_i32_0 = arith.constant 0 : i32
    %c0_i32_1 = arith.constant 0 : i32
    return %arg0, %c0_i32, %c0_i32_0 : i32, i32, i32
  }
  func.func @transform_1(%arg0: i32) -> (i32, i32) {
    %c0_i32 = arith.constant 0 : i32
    %c0_i32_0 = arith.constant 0 : i32
    %c0_i32_1 = arith.constant 0 : i32
    return %c0_i32, %c0_i32_0 : i32, i32
  }
  func.func @transform_2(%arg0: i32) -> (i32, i32, i32) {
    %c0_i32 = arith.constant 0 : i32
    %c0_i32_0 = arith.constant 0 : i32
    %c0_i32_1 = arith.constant 0 : i32
    return %arg0, %c0_i32, %c0_i32_0 : i32, i32, i32
  }
}

</mosaic_0001>

<llo_original>
// kernel: tpu_custom_call.1
$region0: #{tpu_custom_call.1}
  #allocation0 [shape = 'u32[]', space=smem, size = 0x4, offset = 0x4, fixed_abs, tag = 'smem constant byte address 0x4 - core index']
  #allocation1 [shape = 'u32[72,128]{1,0:T(1,128)}', space=vmem, size = 0x9000, scoped, tag = 'internal scratch']
  #allocation2 [shape = 'f32[5,4,256]{2,1,0:T(4,128)}', space=vmem, size = 0x5000, scoped, tag = 'scratch operand']
  #allocation3 [shape = 'f32[5,4,256]{2,1,0:T(4,128)}', space=vmem, size = 0x5000, scoped, tag = 'scratch operand']
  %s0 = inlined_call_operand.hbm [shape: f32[2,4,256], index: 0, kind: input, shape index: {}]
  %s1 = inlined_call_operand.hbm [shape: f32[4,4], index: 1, kind: input, shape index: {}]
  %s2 = inlined_call_operand.hbm [shape: f32[2,4,256], index: 2, kind: output, shape index: {}]
  %s3 = sld [smem:[#allocation0]]
  $region56: #{tpu_custom_call.1} parent=0
    _
  %s5 = ssub.s32 1, %s3
  %s6 = scalar_select 0, %s5, %s3
  $region1: #{tpu_custom_call.1} parent=0
    #allocation4 [shape = 'u8[8192]{0}', space=vmem, size = 0x2000, scoped, tag = 'input window, operand 0']
    #allocation5 [shape = 's32[2]{0}', space=sflag, size = 0x8, scoped, tag = 'scoped memory for tpu_custom_call.1']
    #allocation6 [shape = 's32[2]{0}', space=sflag, size = 0x8, scoped, tag = 'scoped memory for tpu_custom_call.1']
    #allocation7 [shape = 's32[2]{0}', space=sflag, size = 0x8, scoped, tag = 'scoped memory for tpu_custom_call.1']
    #allocation8 [shape = 'u8[2048]{0}', space=smem, size = 0x800, scoped, tag = 'input window, operand 1, single buffered']
    #allocation9 [shape = 'u8[8192]{0}', space=vmem, size = 0x2000, scoped, tag = 'output window, operand 0']
    %7 = vsyncpa [#allocation5], 0
    %s8 = scalar_lea.sflag [#allocation5], 1
    %9 = vsyncpa %s8, 0
    %10 = vsyncpa [#allocation7], 0
    %11 = vsyncpa [#allocation6], 0
    %s12 = scalar_lea.sflag [#allocation6], 1
    %13 = vsyncpa %s12, 0
    loop: start=0, step=1, limit=4
    $region2: #{tpu_custom_call.1} parent=1 // loop_pre_header
      _
    $region3: #{tpu_custom_call.1} parent=1 // loop_header
      %s15 = sphi 0, %s19
      %p16 = scmp.ge.s32.totalorder %s15, 4
      %s25 = sphi 0, %s27
      %s28 = sphi 0, %s25
      %s29 = sphi 0, %s28
      %s45 = sphi 0, %s29
      %s49 = sphi 0, %s49
      %s51 = sphi 0, %s49
      %s52 = sphi 0, %s51
      %s66 = sphi 0, %s52
      %s72 = sphi 0, %s74
      %s75 = sphi 0, %s72
      %s76 = sphi 0, %s75
      %s92 = sphi 0, %s76
    $region4: #{tpu_custom_call.1} parent=1 // loop_header_branch
      %18 = sbr.rel (%p16) target = $region8
    $region5: #{tpu_custom_call.1} parent=1 // loop_body
      %s20 = ssub.s32 %s15, 1
      %s21 = ssub.s32 %s15, 2
      %s22 = sadd.s32 %s15, 1
      %s23 = ssub.s32 %s15, %s22
      %p24 = scmp.eq.s32.totalorder %s23, 0
      %s26 = sadd.s32 %s25, 1
      %s27 = scalar_select %p24, %s25, %s26
      %p30 = pneg %p24
      %p31 = scmp.eq.s32.totalorder %s15, 1
      %p32 = por %p30, %p31
      %p33 = scmp.ne.s32.totalorder %s25, %s28
      %p34 = scmp.eq.s32.totalorder %s15, 0
      %p35 = por %p33, %p34
      %p36 = scmp.ne.s32.totalorder %s25, %s28
      %p37 = scmp.eq.s32.totalorder %s20, 1
      %p38 = por %p36, %p37
      %p39 = scmp.ne.s32.totalorder %s28, %s29
      %p40 = scmp.eq.s32.totalorder %s20, 0
      %p41 = por %p39, %p40
      %p42 = scmp.ne.s32.totalorder %s28, %s29
      %p43 = scmp.eq.s32.totalorder %s21, 1
      %p44 = por %p42, %p43
      %p46 = scmp.ne.s32.totalorder %s29, %s45
      %p47 = scmp.eq.s32.totalorder %s21, 0
      %p48 = por %p46, %p47
      %s50 = sadd.s32 %s49, 1
      %p53 = scmp.eq.s32.totalorder %s15, 1
      %p54 = scmp.ne.s32.totalorder %s49, %s51
      %p55 = scmp.eq.s32.totalorder %s15, 0
      %p56 = por %p54, %p55
      %p57 = scmp.ne.s32.totalorder %s49, %s51
      %p58 = scmp.eq.s32.totalorder %s20, 1
      %p59 = por %p57, %p58
      %p60 = scmp.ne.s32.totalorder %s51, %s52
      %p61 = scmp.eq.s32.totalorder %s20, 0
      %p62 = por %p60, %p61
      %p63 = scmp.ne.s32.totalorder %s51, %s52
      %p64 = scmp.eq.s32.totalorder %s21, 1
      %p65 = por %p63, %p64
      %p67 = scmp.ne.s32.totalorder %s52, %s66
      %p68 = scmp.eq.s32.totalorder %s21, 0
      %p69 = por %p67, %p68
      %s70 = ssub.s32 %s15, %s22
      %p71 = scmp.eq.s32.totalorder %s70, 0
      %s73 = sadd.s32 %s72, 1
      %s74 = scalar_select %p71, %s72, %s73
      %p77 = pneg %p71
      %p78 = scmp.eq.s32.totalorder %s15, 1
      %p79 = por %p77, %p78
      %p80 = scmp.ne.s32.totalorder %s72, %s75
      %p81 = scmp.eq.s32.totalorder %s15, 0
      %p82 = por %p80, %p81
      %p83 = scmp.ne.s32.totalorder %s72, %s75
      %p84 = scmp.eq.s32.totalorder %s20, 1
      %p85 = por %p83, %p84
      %p86 = scmp.ne.s32.totalorder %s75, %s76
      %p87 = scmp.eq.s32.totalorder %s20, 0
      %p88 = por %p86, %p87
      %p89 = scmp.ne.s32.totalorder %s75, %s76
      %p90 = scmp.eq.s32.totalorder %s21, 1
      %p91 = por %p89, %p90
      %p93 = scmp.ne.s32.totalorder %s76, %s92
      %p94 = scmp.eq.s32.totalorder %s21, 0
      %p95 = por %p93, %p94
      %p96 = scmp.le.s32.totalorder 1, %s15
      %p97 = scmp.lt.s32.totalorder %s15, 3
      %p98 = pnand %p96, %p97
      %p99 = pneg %p98
      // Predicated region
      $region9: #{tpu_custom_call.1} parent=5 // pred_check
        _
      $region10: #{tpu_custom_call.1} parent=5 // pred_check_branch
        %101 = sbr.rel (%p98) target = $region12
      $region11: #{tpu_custom_call.1} parent=5 // pred_region
        %s102 = ssub.s32 %s15, 1
        // Predicated region
        $region13: #{tpu_custom_call.1} parent=11 // pred_check
          %p103 = pneg %p62
        $region14: #{tpu_custom_call.1} parent=11 // pred_check_branch
          %105 = sbr.rel (%p103) target = $region16
        $region15: #{tpu_custom_call.1} parent=11 // pred_region
          %107 = vsyncadd [#allocation7], 0
          %s109 = sshll.u32 %s1, 4
          %s110 = int_to_ptr.hbm [resolvable:$true] %s109
          %112 = dma.hbm_to_smem %s110, 64, [#allocation8], [#allocation7]
        $region16: #{tpu_custom_call.1} parent=11 // pred_fallthru
          _
      $region12: #{tpu_custom_call.1} parent=5 // pred_fallthru
        _
      %p113 = scmp.lt.s32.totalorder %s15, 2
      // Predicated region
      $region17: #{tpu_custom_call.1} parent=5 // pred_check
        %p114 = pneg %p113
      $region18: #{tpu_custom_call.1} parent=5 // pred_check_branch
        %116 = sbr.rel (%p114) target = $region20
      $region19: #{tpu_custom_call.1} parent=5 // pred_region
        // Predicated region
        $region21: #{tpu_custom_call.1} parent=19 // pred_check
          %p117 = pneg %p35
        $region22: #{tpu_custom_call.1} parent=19 // pred_check_branch
          %119 = sbr.rel (%p117) target = $region24
        $region23: #{tpu_custom_call.1} parent=19 // pred_region
          %s120 = sand.u32 %s25, 1
          %s121 = scalar_lea.sflag [#allocation5], %s120
          %s122 = sand.u32 %s25, 1
          %s123 = smul.addr %s122, 8
          %s124 = scalar_lea.vmem [#allocation4], %s123
          %126 = vsyncadd %s121, 0
          %s127 = smul.addr %s15, 2
          %s128 = smul.addr %s127, 4
          %s129 = scalar_lea.hbm %s0, %s128
          %s131 = sshll.u32 %s129, 4
          %s132 = int_to_ptr.hbm [resolvable:$true] %s131
          %s133 = sshll.u32 %s124, 4
          %s134 = int_to_ptr.vmem [resolvable:$true] %s133
          %136 = dma.hbm_to_vmem [thread:$0]  %s132, 128, %s134, %s121
        $region24: #{tpu_custom_call.1} parent=19 // pred_fallthru
          _
      $region20: #{tpu_custom_call.1} parent=5 // pred_fallthru
        _
      %p137 = scmp.le.s32.totalorder 1, %s15
      %p138 = scmp.lt.s32.totalorder %s15, 3
      %p139 = pnand %p137, %p138
      %p140 = pneg %p139
      // Predicated region
      $region25: #{tpu_custom_call.1} parent=5 // pred_check
        _
      $region26: #{tpu_custom_call.1} parent=5 // pred_check_branch
        %142 = sbr.rel (%p139) target = $region28
      $region27: #{tpu_custom_call.1} parent=5 // pred_region
        %s143 = ssub.s32 %s15, 1
        %s144 = sand.u32 %s28, 1
        %s145 = scalar_lea.sflag [#allocation5], %s144
        %s146 = sand.u32 %s28, 1
        %s147 = smul.addr %s146, 8
        %s148 = scalar_lea.vmem [#allocation4], %s147
        // Predicated region
        $region29: #{tpu_custom_call.1} parent=27 // pred_check
          %p149 = pneg %p41
        $region30: #{tpu_custom_call.1} parent=27 // pred_check_branch
          %151 = sbr.rel (%p149) target = $region32
        $region31: #{tpu_custom_call.1} parent=27 // pred_region
          %153 = dma.done %s145, 128
        $region32: #{tpu_custom_call.1} parent=27 // pred_fallthru
          _
        // Predicated region
        $region33: #{tpu_custom_call.1} parent=27 // pred_check
          %p154 = pneg %p62
        $region34: #{tpu_custom_call.1} parent=27 // pred_check_branch
          %156 = sbr.rel (%p154) target = $region36
        $region35: #{tpu_custom_call.1} parent=27 // pred_region
          %158 = dma.done [#allocation7], 64
        $region36: #{tpu_custom_call.1} parent=27 // pred_fallthru
          _
        %159 = sfence
        %s160 = sand.u32 %s28, 1
        %s161 = scalar_lea.sflag [#allocation5], %s160
        %s162 = sand.u32 %s28, 1
        %s163 = smul.addr %s162, 8
        %s164 = scalar_lea.vmem [#allocation4], %s163
        %p165 = pneg %p41
        %p166 = pneg %p38
        %p167 = pneg %p62
        %p168 = pneg %p59
        %p169 = pneg %p88
        %p170 = pneg %p85
        %s171 = sand.u32 %s75, 1
        %s172 = scalar_lea.sflag [#allocation6], %s171
        %s173 = sand.u32 %s75, 1
        %s174 = smul.addr %s173, 8
        %s175 = scalar_lea.vmem [#allocation9], %s174
        %v176 = vld [vmem:[%s148] sm:$0xff]
        %s177 = sld [smem:[#allocation8]]
        %s178 = sld [smem:[#allocation8 + $0x1]]
        %s179 = sld [smem:[#allocation8 + $0x2]]
        %s180 = sld [smem:[#allocation8 + $0x3]]
        %s181 = sld [smem:[#allocation8 + $0x80]]
        %s182 = sld [smem:[#allocation8 + $0x81]]
        %s183 = sld [smem:[#allocation8 + $0x82]]
        %s184 = sld [smem:[#allocation8 + $0x83]]
        %s185 = sld [smem:[#allocation8 + $0x100]]
        %s186 = sld [smem:[#allocation8 + $0x101]]
        %s187 = sld [smem:[#allocation8 + $0x102]]
        %s188 = sld [smem:[#allocation8 + $0x103]]
        %s189 = sld [smem:[#allocation8 + $0x180]]
        %s190 = sld [smem:[#allocation8 + $0x181]]
        %s191 = sld [smem:[#allocation8 + $0x182]]
        %s192 = sld [smem:[#allocation8 + $0x183]]
        %193 = vst [vmem:[#allocation2] sm:$0xff] 0.0
        %194 = vst [vmem:[#allocation2 + $0x8] sm:$0xff] 0.0
        %195 = vst [vmem:[#allocation2 + $0x10] sm:$0xff] 0.0
        %196 = vst [vmem:[#allocation2 + $0x18] sm:$0xff] 0.0
        %197 = vst [vmem:[#allocation2 + $0x20] sm:$0xff] 0.0
        %198 = vst [vmem:[#allocation3] sm:$0xff] 0.0
        %199 = vst [vmem:[#allocation3 + $0x8] sm:$0xff] 0.0
        %200 = vst [vmem:[#allocation3 + $0x10] sm:$0xff] 0.0
        %201 = vst [vmem:[#allocation3 + $0x18] sm:$0xff] 0.0
        %202 = vst [vmem:[#allocation3 + $0x20] sm:$0xff] 0.0
        %v203 = vstv %s177
        %v204 = vmul.f32 %v203, %v176
        %v205 = vadd.f32 %v176, %v204
        %v206 = vstv %s181
        %v207 = vmul.f32 %v206, %v176
        %v209 = vrot.slane %v207, 5
        %v210 = vrot.slane %v209, 4
        %v212 = vadd.f32 %v205, %v210
        %v213 = vstv %s185
        %v214 = vmul.f32 %v213, %v176
        %v216 = vrot.slane %v214, 6
        %v217 = vrot.slane %v216, 4
        %v219 = vadd.f32 %v212, %v217
        %v220 = vstv %s189
        %v221 = vmul.f32 %v220, %v176
        %v223 = vrot.slane %v221, 7
        %v224 = vrot.slane %v223, 4
        %v226 = vadd.f32 %v219, %v224
        %v227 = vstv %s178
        %v228 = vmul.f32 %v227, %v176
        %v230 = vrot.slane %v228, 7
        %v232 = vadd.f32 %v176, %v230
        %v233 = vstv %s182
        %v234 = vmul.f32 %v233, %v176
        %v235 = vadd.f32 %v232, %v234
        %v236 = vstv %s186
        %v237 = vmul.f32 %v236, %v176
        %v239 = vrot.slane %v237, 5
        %v240 = vrot.slane %v239, 4
        %v242 = vadd.f32 %v235, %v240
        %v243 = vstv %s190
        %v244 = vmul.f32 %v243, %v176
        %v246 = vrot.slane %v244, 6
        %v247 = vrot.slane %v246, 4
        %v249 = vadd.f32 %v242, %v247
        %v250 = vstv %s179
        %v251 = vmul.f32 %v250, %v176
        %v253 = vrot.slane %v251, 6
        %v255 = vadd.f32 %v176, %v253
        %v256 = vstv %s183
        %v257 = vmul.f32 %v256, %v176
        %v259 = vrot.slane %v257, 7
        %v261 = vadd.f32 %v255, %v259
        %v262 = vstv %s187
        %v263 = vmul.f32 %v262, %v176
        %v264 = vadd.f32 %v261, %v263
        %v265 = vstv %s191
        %v266 = vmul.f32 %v265, %v176
        %v268 = vrot.slane %v266, 5
        %v269 = vrot.slane %v268, 4
        %v271 = vadd.f32 %v264, %v269
        %v272 = vstv %s180
        %v273 = vmul.f32 %v272, %v176
        %v275 = vrot.slane %v273, 5
        %v277 = vadd.f32 %v176, %v275
        %v278 = vstv %s184
        %v279 = vmul.f32 %v278, %v176
        %v281 = vrot.slane %v279, 6
        %v283 = vadd.f32 %v277, %v281
        %v284 = vstv %s188
        %v285 = vmul.f32 %v284, %v176
        %v287 = vrot.slane %v285, 7
        %v289 = vadd.f32 %v283, %v287
        %v290 = vstv %s192
        %v291 = vmul.f32 %v290, %v176
        %v292 = vadd.f32 %v289, %v291
        %v294 = vperm.slane %v226, 0
        %v295 = vperm.slane %v226, 4
        %v299 = vperm.slane %v249, 1
        %v300 = vperm.slane %v249, 5
        %v304 = vperm.slane %v271, 2
        %v305 = vperm.slane %v271, 6
        %v309 = vperm.slane %v292, 3
        %v310 = vperm.slane %v292, 7
        %vm313 = vcmask 1040384
        %v314 = vsel %vm313, %v294, %v299
        %v315 = vsel %vm313, %v295, %v300
        %vm316 = vcmask 1041408
        %v317 = vsel %vm316, %v314, %v304
        %v318 = vsel %vm316, %v315, %v305
        %vm319 = vcmask 1042432
        %v320 = vsel %vm319, %v317, %v309
        %v321 = vsel %vm319, %v318, %v310
        %v322 = vtanh.pop %v320
        %v323 = vtanh.pop %v321
        %324 = vst [vmem:[#allocation2] sm:$0xff] %v176
        %v327 = vrot.slane %v323, 4
        %vm328 = vcmask 1043456
        %v329 = vsel %vm328, %v322, %v327
        %331 = vst [vmem:[#allocation3] sm:$0xff] %v329
        %v332 = vmul.f32 %v203, %v322
        %v333 = vmul.f32 %v203, %v323
        %v336 = vrot.slane %v333, 4
        %v337 = vsel %vm328, %v332, %v336
        %v339 = vadd.f32 %v176, %v337
        %v340 = vmul.f32 %v206, %v322
        %v341 = vmul.f32 %v206, %v323
        %v344 = vrot.slane %v341, 4
        %v345 = vsel %vm328, %v340, %v344
        %v346 = vrot.slane %v345, 5
        %v347 = vrot.slane %v346, 4
        %v349 = vadd.f32 %v339, %v347
        %v350 = vmul.f32 %v213, %v322
        %v351 = vmul.f32 %v213, %v323
        %v354 = vrot.slane %v351, 4
        %v355 = vsel %vm328, %v350, %v354
        %v356 = vrot.slane %v355, 6
        %v357 = vrot.slane %v356, 4
        %v359 = vadd.f32 %v349, %v357
        %v360 = vmul.f32 %v220, %v322
        %v361 = vmul.f32 %v220, %v323
        %v364 = vrot.slane %v361, 4
        %v365 = vsel %vm328, %v360, %v364
        %v366 = vrot.slane %v365, 7
        %v367 = vrot.slane %v366, 4
        %v369 = vadd.f32 %v359, %v367
        %v370 = vmul.f32 %v227, %v322
        %v371 = vmul.f32 %v227, %v323
        %v374 = vrot.slane %v371, 4
        %v375 = vsel %vm328, %v370, %v374
        %v376 = vrot.slane %v375, 7
        %v378 = vadd.f32 %v176, %v376
        %v379 = vmul.f32 %v233, %v322
        %v380 = vmul.f32 %v233, %v323
        %v383 = vrot.slane %v380, 4
        %v384 = vsel %vm328, %v379, %v383
        %v386 = vadd.f32 %v378, %v384
        %v387 = vmul.f32 %v236, %v322
        %v388 = vmul.f32 %v236, %v323
        %v391 = vrot.slane %v388, 4
        %v392 = vsel %vm328, %v387, %v391
        %v393 = vrot.slane %v392, 5
        %v394 = vrot.slane %v393, 4
        %v396 = vadd.f32 %v386, %v394
        %v397 = vmul.f32 %v243, %v322
        %v398 = vmul.f32 %v243, %v323
        %v401 = vrot.slane %v398, 4
        %v402 = vsel %vm328, %v397, %v401
        %v403 = vrot.slane %v402, 6
        %v404 = vrot.slane %v403, 4
        %v406 = vadd.f32 %v396, %v404
        %v407 = vmul.f32 %v250, %v322
        %v408 = vmul.f32 %v250, %v323
        %v411 = vrot.slane %v408, 4
        %v412 = vsel %vm328, %v407, %v411
        %v413 = vrot.slane %v412, 6
        %v415 = vadd.f32 %v176, %v413
        %v416 = vmul.f32 %v256, %v322
        %v417 = vmul.f32 %v256, %v323
        %v420 = vrot.slane %v417, 4
        %v421 = vsel %vm328, %v416, %v420
        %v422 = vrot.slane %v421, 7
        %v424 = vadd.f32 %v415, %v422
        %v425 = vmul.f32 %v262, %v322
        %v426 = vmul.f32 %v262, %v323
        %v429 = vrot.slane %v426, 4
        %v430 = vsel %vm328, %v425, %v429
        %v432 = vadd.f32 %v424, %v430
        %v433 = vmul.f32 %v265, %v322
        %v434 = vmul.f32 %v265, %v323
        %v437 = vrot.slane %v434, 4
        %v438 = vsel %vm328, %v433, %v437
        %v439 = vrot.slane %v438, 5
        %v440 = vrot.slane %v439, 4
        %v442 = vadd.f32 %v432, %v440
        %v443 = vmul.f32 %v272, %v322
        %v444 = vmul.f32 %v272, %v323
        %v447 = vrot.slane %v444, 4
        %v448 = vsel %vm328, %v443, %v447
        %v449 = vrot.slane %v448, 5
        %v451 = vadd.f32 %v176, %v449
        %v452 = vmul.f32 %v278, %v322
        %v453 = vmul.f32 %v278, %v323
        %v456 = vrot.slane %v453, 4
        %v457 = vsel %vm328, %v452, %v456
        %v458 = vrot.slane %v457, 6
        %v460 = vadd.f32 %v451, %v458
        %v461 = vmul.f32 %v284, %v322
        %v462 = vmul.f32 %v284, %v323
        %v465 = vrot.slane %v462, 4
        %v466 = vsel %vm328, %v461, %v465
        %v467 = vrot.slane %v466, 7
        %v469 = vadd.f32 %v460, %v467
        %v470 = vmul.f32 %v290, %v322
        %v471 = vmul.f32 %v290, %v323
        %v474 = vrot.slane %v471, 4
        %v475 = vsel %vm328, %v470, %v474
        %v477 = vadd.f32 %v469, %v475
        %v479 = vperm.slane %v369, 0
        %v480 = vperm.slane %v369, 4
        %v484 = vperm.slane %v406, 1
        %v485 = vperm.slane %v406, 5
        %v489 = vperm.slane %v442, 2
        %v490 = vperm.slane %v442, 6
        %v494 = vperm.slane %v477, 3
        %v495 = vperm.slane %v477, 7
        %v498 = vsel %vm313, %v479, %v484
        %v499 = vsel %vm313, %v480, %v485
        %v500 = vsel %vm316, %v498, %v489
        %v501 = vsel %vm316, %v499, %v490
        %v502 = vsel %vm319, %v500, %v494
        %v503 = vsel %vm319, %v501, %v495
        %v504 = vtanh.pop %v502
        %v505 = vtanh.pop %v503
        %s506 = scalar_lea.vmem [#allocation2], 8
        %507 = vst [vmem:[%s506] sm:$0xff] %v329
        %v510 = vrot.slane %v505, 4
        %v511 = vsel %vm328, %v504, %v510
        %s513 = scalar_lea.vmem [#allocation3], 8
        %514 = vst [vmem:[%s513] sm:$0xff] %v511
        loop: start=2, step=1, limit=20
        $region37: #{tpu_custom_call.1} parent=27 // loop_pre_header
          _
        $region38: #{tpu_custom_call.1} parent=27 // loop_header
          %s516 = sphi 2, %s520
          %p517 = scmp.ge.s32.totalorder %s516, 20
          %v521 = vphi %v176, %v1497
          %s522 = sphi inf, %s1498
          %p523 = pphi 0, %p1500
        $region39: #{tpu_custom_call.1} parent=27 // loop_header_branch
          %519 = sbr.rel (%p517) target = $region43
        $region40: #{tpu_custom_call.1} parent=27 // loop_body
          %p524 = scmp.lt.s32.totalorder %s516, 5
          %s525 = scalar_select %p524, %s516, 5
          %v526 = vld [vmem:[#allocation2] sm:$0xff]
          %v527 = vld [vmem:[%s506] sm:$0xff]
          %s528 = scalar_lea.vmem [#allocation2], 16
          %v529 = vld [vmem:[%s528] sm:$0xff]
          %s530 = scalar_lea.vmem [#allocation2], 24
          %v531 = vld [vmem:[%s530] sm:$0xff]
          %s532 = scalar_lea.vmem [#allocation2], 32
          %v533 = vld [vmem:[%s532] sm:$0xff]
          %v534 = vld [vmem:[#allocation3] sm:$0xff]
          %v535 = vld [vmem:[%s513] sm:$0xff]
          %s536 = scalar_lea.vmem [#allocation3], 16
          %v537 = vld [vmem:[%s536] sm:$0xff]
          %s538 = scalar_lea.vmem [#allocation3], 24
          %v539 = vld [vmem:[%s538] sm:$0xff]
          %s540 = scalar_lea.vmem [#allocation3], 32
          %v541 = vld [vmem:[%s540] sm:$0xff]
          %v542 = vsub.f32 %v534, %v526
          %v543 = vsub.f32 %v535, %v527
          %v544 = vsub.f32 %v537, %v529
          %v545 = vsub.f32 %v539, %v531
          %v546 = vsub.f32 %v541, %v533
          %p547 = scmp.gt.s32.totalorder %s525, 0
          %s548 = scalar_select %p547, 1, 0
          %s549 = scvt.s32.f32 %s548
          %p550 = scmp.gt.s32.totalorder %s525, 1
          %s551 = scalar_select %p550, 1, 0
          %s552 = scvt.s32.f32 %s551
          %p553 = scmp.gt.s32.totalorder %s525, 2
          %s554 = scalar_select %p553, 1, 0
          %s555 = scvt.s32.f32 %s554
          %p556 = scmp.gt.s32.totalorder %s525, 3
          %s557 = scalar_select %p556, 1, 0
          %s558 = scvt.s32.f32 %s557
          %p559 = scmp.gt.s32.totalorder %s525, 4
          %s560 = scalar_select %p559, 1, 0
          %s561 = scvt.s32.f32 %s560
          %v562 = vmul.f32 %v542, %v542
          %564 = vst [vmem:[#allocation1] ss:$2 sm:$0xff] %v562
          %v565 = vld.sshfl [vmem:[#allocation1] sm:$0xff pattern:$0x75316420]
          %v566 = vld.sshfl [vmem:[#allocation1 + $0x8] sm:$0xff pattern:$0x75316420]
          %v569 = vsel %vm328, %v565, 0.0
          %v570 = vsel %vm328, %v566, 0.0
          %v571 = vadd.f32 %v569, %v570
          %572 = vadd.xlane.f32.xlu0 %v571
          %v573 = vpop.xlane.xlu0 %572
          %v574 = vrot.slane %v573, 4
          %v575 = vadd.f32 %v573, %v574
          %v576 = vrot.slane %v575, 2
          %v577 = vadd.f32 %v575, %v576
          %v578 = vrot.slane %v577, 1
          %v579 = vadd.f32 %v577, %v578
          %s580 = vtos %v579
          %v581 = vmul.f32 %v542, %v543
          %583 = vst [vmem:[#allocation1] ss:$2 sm:$0xff] %v581
          %v584 = vld.sshfl [vmem:[#allocation1] sm:$0xff pattern:$0x75316420]
          %v585 = vld.sshfl [vmem:[#allocation1 + $0x8] sm:$0xff pattern:$0x75316420]
          %v588 = vsel %vm328, %v584, 0.0
          %v589 = vsel %vm328, %v585, 0.0
          %v590 = vadd.f32 %v588, %v589
          %591 = vadd.xlane.f32.xlu0 %v590
          %v592 = vpop.xlane.xlu0 %591
          %v593 = vrot.slane %v592, 4
          %v594 = vadd.f32 %v592, %v593
          %v595 = vrot.slane %v594, 2
          %v596 = vadd.f32 %v594, %v595
          %v597 = vrot.slane %v596, 1
          %v598 = vadd.f32 %v596, %v597
          %s599 = vtos %v598
          %v600 = vmul.f32 %v542, %v544
          %602 = vst [vmem:[#allocation1] ss:$2 sm:$0xff] %v600
          %v603 = vld.sshfl [vmem:[#allocation1] sm:$0xff pattern:$0x75316420]
          %v604 = vld.sshfl [vmem:[#allocation1 + $0x8] sm:$0xff pattern:$0x75316420]
          %v607 = vsel %vm328, %v603, 0.0
          %v608 = vsel %vm328, %v604, 0.0
          %v609 = vadd.f32 %v607, %v608
          %610 = vadd.xlane.f32.xlu0 %v609
          %v611 = vpop.xlane.xlu0 %610
          %v612 = vrot.slane %v611, 4
          %v613 = vadd.f32 %v611, %v612
          %v614 = vrot.slane %v613, 2
          %v615 = vadd.f32 %v613, %v614
          %v616 = vrot.slane %v615, 1
          %v617 = vadd.f32 %v615, %v616
          %s618 = vtos %v617
          %v619 = vmul.f32 %v542, %v545
          %621 = vst [vmem:[#allocation1] ss:$2 sm:$0xff] %v619
          %v622 = vld.sshfl [vmem:[#allocation1] sm:$0xff pattern:$0x75316420]
          %v623 = vld.sshfl [vmem:[#allocation1 + $0x8] sm:$0xff pattern:$0x75316420]
          %v626 = vsel %vm328, %v622, 0.0
          %v627 = vsel %vm328, %v623, 0.0
          %v628 = vadd.f32 %v626, %v627
          %629 = vadd.xlane.f32.xlu0 %v628
          %v630 = vpop.xlane.xlu0 %629
          %v631 = vrot.slane %v630, 4
          %v632 = vadd.f32 %v630, %v631
          %v633 = vrot.slane %v632, 2
          %v634 = vadd.f32 %v632, %v633
          %v635 = vrot.slane %v634, 1
          %v636 = vadd.f32 %v634, %v635
          %s637 = vtos %v636
          %v638 = vmul.f32 %v542, %v546
          %640 = vst [vmem:[#allocation1] ss:$2 sm:$0xff] %v638
          %v641 = vld.sshfl [vmem:[#allocation1] sm:$0xff pattern:$0x75316420]
          %v642 = vld.sshfl [vmem:[#allocation1 + $0x8] sm:$0xff pattern:$0x75316420]
          %v645 = vsel %vm328, %v641, 0.0
          %v646 = vsel %vm328, %v642, 0.0
          %v647 = vadd.f32 %v645, %v646
          %648 = vadd.xlane.f32.xlu0 %v647
          %v649 = vpop.xlane.xlu0 %648
          %v650 = vrot.slane %v649, 4
          %v651 = vadd.f32 %v649, %v650
          %v652 = vrot.slane %v651, 2
          %v653 = vadd.f32 %v651, %v652
          %v654 = vrot.slane %v653, 1
          %v655 = vadd.f32 %v653, %v654
          %s656 = vtos %v655
          %v657 = vmul.f32 %v543, %v543
          %659 = vst [vmem:[#allocation1] ss:$2 sm:$0xff] %v657
          %v660 = vld.sshfl [vmem:[#allocation1] sm:$0xff pattern:$0x75316420]
          %v661 = vld.sshfl [vmem:[#allocation1 + $0x8] sm:$0xff pattern:$0x75316420]
          %v664 = vsel %vm328, %v660, 0.0
          %v665 = vsel %vm328, %v661, 0.0
          %v666 = vadd.f32 %v664, %v665
          %667 = vadd.xlane.f32.xlu0 %v666
          %v668 = vpop.xlane.xlu0 %667
          %v669 = vrot.slane %v668, 4
          %v670 = vadd.f32 %v668, %v669
          %v671 = vrot.slane %v670, 2
          %v672 = vadd.f32 %v670, %v671
          %v673 = vrot.slane %v672, 1
          %v674 = vadd.f32 %v672, %v673
          %s675 = vtos %v674
          %v676 = vmul.f32 %v543, %v544
          %678 = vst [vmem:[#allocation1] ss:$2 sm:$0xff] %v676
          %v679 = vld.sshfl [vmem:[#allocation1] sm:$0xff pattern:$0x75316420]
          %v680 = vld.sshfl [vmem:[#allocation1 + $0x8] sm:$0xff pattern:$0x75316420]
          %v683 = vsel %vm328, %v679, 0.0
          %v684 = vsel %vm328, %v680, 0.0
          %v685 = vadd.f32 %v683, %v684
          %686 = vadd.xlane.f32.xlu0 %v685
          %v687 = vpop.xlane.xlu0 %686
          %v688 = vrot.slane %v687, 4
          %v689 = vadd.f32 %v687, %v688
          %v690 = vrot.slane %v689, 2
          %v691 = vadd.f32 %v689, %v690
          %v692 = vrot.slane %v691, 1
          %v693 = vadd.f32 %v691, %v692
          %s694 = vtos %v693
          %v695 = vmul.f32 %v543, %v545
          %697 = vst [vmem:[#allocation1] ss:$2 sm:$0xff] %v695
          %v698 = vld.sshfl [vmem:[#allocation1] sm:$0xff pattern:$0x75316420]
          %v699 = vld.sshfl [vmem:[#allocation1 + $0x8] sm:$0xff pattern:$0x75316420]
          %v702 = vsel %vm328, %v698, 0.0
          %v703 = vsel %vm328, %v699, 0.0
          %v704 = vadd.f32 %v702, %v703
          %705 = vadd.xlane.f32.xlu0 %v704
          %v706 = vpop.xlane.xlu0 %705
          %v707 = vrot.slane %v706, 4
          %v708 = vadd.f32 %v706, %v707
          %v709 = vrot.slane %v708, 2
          %v710 = vadd.f32 %v708, %v709
          %v711 = vrot.slane %v710, 1
          %v712 = vadd.f32 %v710, %v711
          %s713 = vtos %v712
          %v714 = vmul.f32 %v543, %v546
          %716 = vst [vmem:[#allocation1] ss:$2 sm:$0xff] %v714
          %v717 = vld.sshfl [vmem:[#allocation1] sm:$0xff pattern:$0x75316420]
          %v718 = vld.sshfl [vmem:[#allocation1 + $0x8] sm:$0xff pattern:$0x75316420]
          %v721 = vsel %vm328, %v717, 0.0
          %v722 = vsel %vm328, %v718, 0.0
          %v723 = vadd.f32 %v721, %v722
          %724 = vadd.xlane.f32.xlu0 %v723
          %v725 = vpop.xlane.xlu0 %724
          %v726 = vrot.slane %v725, 4
          %v727 = vadd.f32 %v725, %v726
          %v728 = vrot.slane %v727, 2
          %v729 = vadd.f32 %v727, %v728
          %v730 = vrot.slane %v729, 1
          %v731 = vadd.f32 %v729, %v730
          %s732 = vtos %v731
          %v733 = vmul.f32 %v544, %v544
          %735 = vst [vmem:[#allocation1] ss:$2 sm:$0xff] %v733
          %v736 = vld.sshfl [vmem:[#allocation1] sm:$0xff pattern:$0x75316420]
          %v737 = vld.sshfl [vmem:[#allocation1 + $0x8] sm:$0xff pattern:$0x75316420]
          %v740 = vsel %vm328, %v736, 0.0
          %v741 = vsel %vm328, %v737, 0.0
          %v742 = vadd.f32 %v740, %v741
          %743 = vadd.xlane.f32.xlu0 %v742
          %v744 = vpop.xlane.xlu0 %743
          %v745 = vrot.slane %v744, 4
          %v746 = vadd.f32 %v744, %v745
          %v747 = vrot.slane %v746, 2
          %v748 = vadd.f32 %v746, %v747
          %v749 = vrot.slane %v748, 1
          %v750 = vadd.f32 %v748, %v749
          %s751 = vtos %v750
          %v752 = vmul.f32 %v544, %v545
          %754 = vst [vmem:[#allocation1] ss:$2 sm:$0xff] %v752
          %v755 = vld.sshfl [vmem:[#allocation1] sm:$0xff pattern:$0x75316420]
          %v756 = vld.sshfl [vmem:[#allocation1 + $0x8] sm:$0xff pattern:$0x75316420]
          %v759 = vsel %vm328, %v755, 0.0
          %v760 = vsel %vm328, %v756, 0.0
          %v761 = vadd.f32 %v759, %v760
          %762 = vadd.xlane.f32.xlu0 %v761
          %v763 = vpop.xlane.xlu0 %762
          %v764 = vrot.slane %v763, 4
          %v765 = vadd.f32 %v763, %v764
          %v766 = vrot.slane %v765, 2
          %v767 = vadd.f32 %v765, %v766
          %v768 = vrot.slane %v767, 1
          %v769 = vadd.f32 %v767, %v768
          %s770 = vtos %v769
          %v771 = vmul.f32 %v544, %v546
          %773 = vst [vmem:[#allocation1] ss:$2 sm:$0xff] %v771
          %v774 = vld.sshfl [vmem:[#allocation1] sm:$0xff pattern:$0x75316420]
          %v775 = vld.sshfl [vmem:[#allocation1 + $0x8] sm:$0xff pattern:$0x75316420]
          %v778 = vsel %vm328, %v774, 0.0
          %v779 = vsel %vm328, %v775, 0.0
          %v780 = vadd.f32 %v778, %v779
          %781 = vadd.xlane.f32.xlu0 %v780
          %v782 = vpop.xlane.xlu0 %781
          %v783 = vrot.slane %v782, 4
          %v784 = vadd.f32 %v782, %v783
          %v785 = vrot.slane %v784, 2
          %v786 = vadd.f32 %v784, %v785
          %v787 = vrot.slane %v786, 1
          %v788 = vadd.f32 %v786, %v787
          %s789 = vtos %v788
          %v790 = vmul.f32 %v545, %v545
          %792 = vst [vmem:[#allocation1] ss:$2 sm:$0xff] %v790
          %v793 = vld.sshfl [vmem:[#allocation1] sm:$0xff pattern:$0x75316420]
          %v794 = vld.sshfl [vmem:[#allocation1 + $0x8] sm:$0xff pattern:$0x75316420]
          %v797 = vsel %vm328, %v793, 0.0
          %v798 = vsel %vm328, %v794, 0.0
          %v799 = vadd.f32 %v797, %v798
          %800 = vadd.xlane.f32.xlu0 %v799
          %v801 = vpop.xlane.xlu0 %800
          %v802 = vrot.slane %v801, 4
          %v803 = vadd.f32 %v801, %v802
          %v804 = vrot.slane %v803, 2
          %v805 = vadd.f32 %v803, %v804
          %v806 = vrot.slane %v805, 1
          %v807 = vadd.f32 %v805, %v806
          %s808 = vtos %v807
          %v809 = vmul.f32 %v545, %v546
          %811 = vst [vmem:[#allocation1] ss:$2 sm:$0xff] %v809
          %v812 = vld.sshfl [vmem:[#allocation1] sm:$0xff pattern:$0x75316420]
          %v813 = vld.sshfl [vmem:[#allocation1 + $0x8] sm:$0xff pattern:$0x75316420]
          %v816 = vsel %vm328, %v812, 0.0
          %v817 = vsel %vm328, %v813, 0.0
          %v818 = vadd.f32 %v816, %v817
          %819 = vadd.xlane.f32.xlu0 %v818
          %v820 = vpop.xlane.xlu0 %819
          %v821 = vrot.slane %v820, 4
          %v822 = vadd.f32 %v820, %v821
          %v823 = vrot.slane %v822, 2
          %v824 = vadd.f32 %v822, %v823
          %v825 = vrot.slane %v824, 1
          %v826 = vadd.f32 %v824, %v825
          %s827 = vtos %v826
          %v828 = vmul.f32 %v546, %v546
          %830 = vst [vmem:[#allocation1] ss:$2 sm:$0xff] %v828
          %v831 = vld.sshfl [vmem:[#allocation1] sm:$0xff pattern:$0x75316420]
          %v832 = vld.sshfl [vmem:[#allocation1 + $0x8] sm:$0xff pattern:$0x75316420]
          %v835 = vsel %vm328, %v831, 0.0
          %v836 = vsel %vm328, %v832, 0.0
          %v837 = vadd.f32 %v835, %v836
          %838 = vadd.xlane.f32.xlu0 %v837
          %v839 = vpop.xlane.xlu0 %838
          %v840 = vrot.slane %v839, 4
          %v841 = vadd.f32 %v839, %v840
          %v842 = vrot.slane %v841, 2
          %v843 = vadd.f32 %v841, %v842
          %v844 = vrot.slane %v843, 1
          %v845 = vadd.f32 %v843, %v844
          %s846 = vtos %v845
          %s847 = smul.f32 %s580, %s549
          %s848 = smul.f32 %s847, %s549
          %s849 = smul.f32 %s549, 0.0001
          %s850 = ssub.f32 1.0, %s549
          %s851 = sadd.f32 %s849, %s850
          %s852 = sadd.f32 %s848, %s851
          %s853 = smul.f32 %s599, %s549
          %s854 = smul.f32 %s853, %s552
          %s855 = sadd.f32 %s854, 0.0
          %s856 = smul.f32 %s618, %s549
          %s857 = smul.f32 %s856, %s555
          %s858 = sadd.f32 %s857, 0.0
          %s859 = smul.f32 %s637, %s549
          %s860 = smul.f32 %s859, %s558
          %s861 = sadd.f32 %s860, 0.0
          %s862 = smul.f32 %s656, %s549
          %s863 = smul.f32 %s862, %s561
          %s864 = sadd.f32 %s863, 0.0
          %s865 = smul.f32 %s599, %s552
          %s866 = smul.f32 %s865, %s549
          %s867 = sadd.f32 %s866, 0.0
          %s868 = smul.f32 %s675, %s552
          %s869 = smul.f32 %s868, %s552
          %s870 = smul.f32 %s552, 0.0001
          %s871 = ssub.f32 1.0, %s552
          %s872 = sadd.f32 %s870, %s871
          %s873 = sadd.f32 %s869, %s872
          %s874 = smul.f32 %s694, %s552
          %s875 = smul.f32 %s874, %s555
          %s876 = sadd.f32 %s875, 0.0
          %s877 = smul.f32 %s713, %s552
          %s878 = smul.f32 %s877, %s558
          %s879 = sadd.f32 %s878, 0.0
          %s880 = smul.f32 %s732, %s552
          %s881 = smul.f32 %s880, %s561
          %s882 = sadd.f32 %s881, 0.0
          %s883 = smul.f32 %s618, %s555
          %s884 = smul.f32 %s883, %s549
          %s885 = sadd.f32 %s884, 0.0
          %s886 = smul.f32 %s694, %s555
          %s887 = smul.f32 %s886, %s552
          %s888 = sadd.f32 %s887, 0.0
          %s889 = smul.f32 %s751, %s555
          %s890 = smul.f32 %s889, %s555
          %s891 = smul.f32 %s555, 0.0001
          %s892 = ssub.f32 1.0, %s555
          %s893 = sadd.f32 %s891, %s892
          %s894 = sadd.f32 %s890, %s893
          %s895 = smul.f32 %s770, %s555
          %s896 = smul.f32 %s895, %s558
          %s897 = sadd.f32 %s896, 0.0
          %s898 = smul.f32 %s789, %s555
          %s899 = smul.f32 %s898, %s561
          %s900 = sadd.f32 %s899, 0.0
          %s901 = smul.f32 %s637, %s558
          %s902 = smul.f32 %s901, %s549
          %s903 = sadd.f32 %s902, 0.0
          %s904 = smul.f32 %s713, %s558
          %s905 = smul.f32 %s904, %s552
          %s906 = sadd.f32 %s905, 0.0
          %s907 = smul.f32 %s770, %s558
          %s908 = smul.f32 %s907, %s555
          %s909 = sadd.f32 %s908, 0.0
          %s910 = smul.f32 %s808, %s558
          %s911 = smul.f32 %s910, %s558
          %s912 = smul.f32 %s558, 0.0001
          %s913 = ssub.f32 1.0, %s558
          %s914 = sadd.f32 %s912, %s913
          %s915 = sadd.f32 %s911, %s914
          %s916 = smul.f32 %s827, %s558
          %s917 = smul.f32 %s916, %s561
          %s918 = sadd.f32 %s917, 0.0
          %s919 = smul.f32 %s656, %s561
          %s920 = smul.f32 %s919, %s549
          %s921 = sadd.f32 %s920, 0.0
          %s922 = smul.f32 %s732, %s561
          %s923 = smul.f32 %s922, %s552
          %s924 = sadd.f32 %s923, 0.0
          %s925 = smul.f32 %s789, %s561
          %s926 = smul.f32 %s925, %s555
          %s927 = sadd.f32 %s926, 0.0
          %s928 = smul.f32 %s827, %s561
          %s929 = smul.f32 %s928, %s558
          %s930 = sadd.f32 %s929, 0.0
          %s931 = smul.f32 %s846, %s561
          %s932 = smul.f32 %s931, %s561
          %s933 = smul.f32 %s561, 0.0001
          %s934 = ssub.f32 1.0, %s561
          %s935 = sadd.f32 %s933, %s934
          %s936 = sadd.f32 %s932, %s935
          %v937 = vstv %s852
          %v938 = vrcp.pop %v937
          %v939 = vmul.f32 %v937, %v938
          %v940 = vsub.f32 1.0, %v939
          %v941 = vmul.f32 %v938, %v940
          %v942 = vadd.f32 %v938, %v941
          %vm943 = vweird.f32 %v937
          %vm944 = vweird.f32 %v938
          %vm945 = vmor %vm943, %vm944
          %v946 = vsel %vm945, %v938, %v942
          %v947 = vand.u32 2147483647, %v937
          %vm948 = vcmp.eq.f32.partialorder %v947, 8.507059e+37
          %v949 = vand.u32 %v937, 2147483648
          %v950 = vor.u32 1.1754944e-38, %v949
          %v951 = vsel %vm948, %v950, %v946
          %s952 = vtos %v951
          %s953 = smul.f32 %s867, %s952
          %s954 = smul.f32 %s953, %s855
          %s955 = ssub.f32 %s873, %s954
          %s956 = smul.f32 %s953, %s858
          %s957 = ssub.f32 %s876, %s956
          %s958 = smul.f32 %s953, %s861
          %s959 = ssub.f32 %s879, %s958
          %s960 = smul.f32 %s953, %s864
          %s961 = ssub.f32 %s882, %s960
          %s962 = smul.f32 %s953, %s549
          %s963 = ssub.f32 %s552, %s962
          %s964 = smul.f32 %s885, %s952
          %s965 = smul.f32 %s964, %s855
          %s966 = ssub.f32 %s888, %s965
          %s967 = smul.f32 %s964, %s858
          %s968 = ssub.f32 %s894, %s967
          %s969 = smul.f32 %s964, %s861
          %s970 = ssub.f32 %s897, %s969
          %s971 = smul.f32 %s964, %s864
          %s972 = ssub.f32 %s900, %s971
          %s973 = smul.f32 %s964, %s549
          %s974 = ssub.f32 %s555, %s973
          %s975 = smul.f32 %s903, %s952
          %s976 = smul.f32 %s975, %s855
          %s977 = ssub.f32 %s906, %s976
          %s978 = smul.f32 %s975, %s858
          %s979 = ssub.f32 %s909, %s978
          %s980 = smul.f32 %s975, %s861
          %s981 = ssub.f32 %s915, %s980
          %s982 = smul.f32 %s975, %s864
          %s983 = ssub.f32 %s918, %s982
          %s984 = smul.f32 %s975, %s549
          %s985 = ssub.f32 %s558, %s984
          %s986 = smul.f32 %s921, %s952
          %s987 = smul.f32 %s986, %s855
          %s988 = ssub.f32 %s924, %s987
          %s989 = smul.f32 %s986, %s858
          %s990 = ssub.f32 %s927, %s989
          %s991 = smul.f32 %s986, %s861
          %s992 = ssub.f32 %s930, %s991
          %s993 = smul.f32 %s986, %s864
          %s994 = ssub.f32 %s936, %s993
          %s995 = smul.f32 %s986, %s549
          %s996 = ssub.f32 %s561, %s995
          %v997 = vstv %s955
          %v998 = vrcp.pop %v997
          %v999 = vmul.f32 %v997, %v998
          %v1000 = vsub.f32 1.0, %v999
          %v1001 = vmul.f32 %v998, %v1000
          %v1002 = vadd.f32 %v998, %v1001
          %vm1003 = vweird.f32 %v997
          %vm1004 = vweird.f32 %v998
          %vm1005 = vmor %vm1003, %vm1004
          %v1006 = vsel %vm1005, %v998, %v1002
          %v1007 = vand.u32 2147483647, %v997
          %vm1008 = vcmp.eq.f32.partialorder %v1007, 8.507059e+37
          %v1009 = vand.u32 %v997, 2147483648
          %v1010 = vor.u32 1.1754944e-38, %v1009
          %v1011 = vsel %vm1008, %v1010, %v1006
          %s1012 = vtos %v1011
          %s1013 = smul.f32 %s855, %s1012
          %s1014 = smul.f32 %s1013, %s957
          %s1015 = ssub.f32 %s858, %s1014
          %s1016 = smul.f32 %s1013, %s959
          %s1017 = ssub.f32 %s861, %s1016
          %s1018 = smul.f32 %s1013, %s961
          %s1019 = ssub.f32 %s864, %s1018
          %s1020 = smul.f32 %s1013, %s963
          %s1021 = ssub.f32 %s549, %s1020
          %s1022 = smul.f32 %s966, %s1012
          %s1023 = smul.f32 %s1022, %s957
          %s1024 = ssub.f32 %s968, %s1023
          %s1025 = smul.f32 %s1022, %s959
          %s1026 = ssub.f32 %s970, %s1025
          %s1027 = smul.f32 %s1022, %s961
          %s1028 = ssub.f32 %s972, %s1027
          %s1029 = smul.f32 %s1022, %s963
          %s1030 = ssub.f32 %s974, %s1029
          %s1031 = smul.f32 %s977, %s1012
          %s1032 = smul.f32 %s1031, %s957
          %s1033 = ssub.f32 %s979, %s1032
          %s1034 = smul.f32 %s1031, %s959
          %s1035 = ssub.f32 %s981, %s1034
          %s1036 = smul.f32 %s1031, %s961
          %s1037 = ssub.f32 %s983, %s1036
          %s1038 = smul.f32 %s1031, %s963
          %s1039 = ssub.f32 %s985, %s1038
          %s1040 = smul.f32 %s988, %s1012
          %s1041 = smul.f32 %s1040, %s957
          %s1042 = ssub.f32 %s990, %s1041
          %s1043 = smul.f32 %s1040, %s959
          %s1044 = ssub.f32 %s992, %s1043
          %s1045 = smul.f32 %s1040, %s961
          %s1046 = ssub.f32 %s994, %s1045
          %s1047 = smul.f32 %s1040, %s963
          %s1048 = ssub.f32 %s996, %s1047
          %v1049 = vstv %s1024
          %v1050 = vrcp.pop %v1049
          %v1051 = vmul.f32 %v1049, %v1050
          %v1052 = vsub.f32 1.0, %v1051
          %v1053 = vmul.f32 %v1050, %v1052
          %v1054 = vadd.f32 %v1050, %v1053
          %vm1055 = vweird.f32 %v1049
          %vm1056 = vweird.f32 %v1050
          %vm1057 = vmor %vm1055, %vm1056
          %v1058 = vsel %vm1057, %v1050, %v1054
          %v1059 = vand.u32 2147483647, %v1049
          %vm1060 = vcmp.eq.f32.partialorder %v1059, 8.507059e+37
          %v1061 = vand.u32 %v1049, 2147483648
          %v1062 = vor.u32 1.1754944e-38, %v1061
          %v1063 = vsel %vm1060, %v1062, %v1058
          %s1064 = vtos %v1063
          %s1065 = smul.f32 %s1015, %s1064
          %s1066 = smul.f32 %s1065, %s1026
          %s1067 = ssub.f32 %s1017, %s1066
          %s1068 = smul.f32 %s1065, %s1028
          %s1069 = ssub.f32 %s1019, %s1068
          %s1070 = smul.f32 %s1065, %s1030
          %s1071 = ssub.f32 %s1021, %s1070
          %s1072 = smul.f32 %s957, %s1064
          %s1073 = smul.f32 %s1072, %s1026
          %s1074 = ssub.f32 %s959, %s1073
          %s1075 = smul.f32 %s1072, %s1028
          %s1076 = ssub.f32 %s961, %s1075
          %s1077 = smul.f32 %s1072, %s1030
          %s1078 = ssub.f32 %s963, %s1077
          %s1079 = smul.f32 %s1033, %s1064
          %s1080 = smul.f32 %s1079, %s1026
          %s1081 = ssub.f32 %s1035, %s1080
          %s1082 = smul.f32 %s1079, %s1028
          %s1083 = ssub.f32 %s1037, %s1082
          %s1084 = smul.f32 %s1079, %s1030
          %s1085 = ssub.f32 %s1039, %s1084
          %s1086 = smul.f32 %s1042, %s1064
          %s1087 = smul.f32 %s1086, %s1026
          %s1088 = ssub.f32 %s1044, %s1087
          %s1089 = smul.f32 %s1086, %s1028
          %s1090 = ssub.f32 %s1046, %s1089
          %s1091 = smul.f32 %s1086, %s1030
          %s1092 = ssub.f32 %s1048, %s1091
          %v1093 = vstv %s1081
          %v1094 = vrcp.pop %v1093
          %v1095 = vmul.f32 %v1093, %v1094
          %v1096 = vsub.f32 1.0, %v1095
          %v1097 = vmul.f32 %v1094, %v1096
          %v1098 = vadd.f32 %v1094, %v1097
          %vm1099 = vweird.f32 %v1093
          %vm1100 = vweird.f32 %v1094
          %vm1101 = vmor %vm1099, %vm1100
          %v1102 = vsel %vm1101, %v1094, %v1098
          %v1103 = vand.u32 2147483647, %v1093
          %vm1104 = vcmp.eq.f32.partialorder %v1103, 8.507059e+37
          %v1105 = vand.u32 %v1093, 2147483648
          %v1106 = vor.u32 1.1754944e-38, %v1105
          %v1107 = vsel %vm1104, %v1106, %v1102
          %s1108 = vtos %v1107
          %s1109 = smul.f32 %s1067, %s1108
          %s1110 = smul.f32 %s1109, %s1083
          %s1111 = ssub.f32 %s1069, %s1110
          %s1112 = smul.f32 %s1109, %s1085
          %s1113 = ssub.f32 %s1071, %s1112
          %s1114 = smul.f32 %s1074, %s1108
          %s1115 = smul.f32 %s1114, %s1083
          %s1116 = ssub.f32 %s1076, %s1115
          %s1117 = smul.f32 %s1114, %s1085
          %s1118 = ssub.f32 %s1078, %s1117
          %s1119 = smul.f32 %s1026, %s1108
          %s1120 = smul.f32 %s1119, %s1083
          %s1121 = ssub.f32 %s1028, %s1120
          %s1122 = smul.f32 %s1119, %s1085
          %s1123 = ssub.f32 %s1030, %s1122
          %s1124 = smul.f32 %s1088, %s1108
          %s1125 = smul.f32 %s1124, %s1083
          %s1126 = ssub.f32 %s1090, %s1125
          %s1127 = smul.f32 %s1124, %s1085
          %s1128 = ssub.f32 %s1092, %s1127
          %v1129 = vstv %s1126
          %v1130 = vrcp.pop %v1129
          %v1131 = vmul.f32 %v1129, %v1130
          %v1132 = vsub.f32 1.0, %v1131
          %v1133 = vmul.f32 %v1130, %v1132
          %v1134 = vadd.f32 %v1130, %v1133
          %vm1135 = vweird.f32 %v1129
          %vm1136 = vweird.f32 %v1130
          %vm1137 = vmor %vm1135, %vm1136
          %v1138 = vsel %vm1137, %v1130, %v1134
          %v1139 = vand.u32 2147483647, %v1129
          %vm1140 = vcmp.eq.f32.partialorder %v1139, 8.507059e+37
          %v1141 = vand.u32 %v1129, 2147483648
          %v1142 = vor.u32 1.1754944e-38, %v1141
          %v1143 = vsel %vm1140, %v1142, %v1138
          %s1144 = vtos %v1143
          %s1145 = smul.f32 %s1111, %s1144
          %s1146 = smul.f32 %s1145, %s1128
          %s1147 = ssub.f32 %s1113, %s1146
          %s1148 = smul.f32 %s1116, %s1144
          %s1149 = smul.f32 %s1148, %s1128
          %s1150 = ssub.f32 %s1118, %s1149
          %s1151 = smul.f32 %s1121, %s1144
          %s1152 = smul.f32 %s1151, %s1128
          %s1153 = ssub.f32 %s1123, %s1152
          %s1154 = smul.f32 %s1083, %s1144
          %s1155 = smul.f32 %s1154, %s1128
          %s1156 = ssub.f32 %s1085, %s1155
          %v1157 = vstv %s852
          %v1158 = vrcp.pop %v1157
          %v1159 = vmul.f32 %v1157, %v1158
          %v1160 = vsub.f32 1.0, %v1159
          %v1161 = vmul.f32 %v1158, %v1160
          %v1162 = vadd.f32 %v1158, %v1161
          %vm1163 = vweird.f32 %v1157
          %vm1164 = vweird.f32 %v1158
          %vm1165 = vmor %vm1163, %vm1164
          %v1166 = vsel %vm1165, %v1158, %v1162
          %v1167 = vand.u32 2147483647, %v1157
          %vm1168 = vcmp.eq.f32.partialorder %v1167, 8.507059e+37
          %v1169 = vand.u32 %v1157, 2147483648
          %v1170 = vor.u32 1.1754944e-38, %v1169
          %v1171 = vsel %vm1168, %v1170, %v1166
          %s1172 = vtos %v1171
          %s1173 = smul.f32 %s1147, %s1172
          %v1174 = vstv %s955
          %v1175 = vrcp.pop %v1174
          %v1176 = vmul.f32 %v1174, %v1175
          %v1177 = vsub.f32 1.0, %v1176
          %v1178 = vmul.f32 %v1175, %v1177
          %v1179 = vadd.f32 %v1175, %v1178
          %vm1180 = vweird.f32 %v1174
          %vm1181 = vweird.f32 %v1175
          %vm1182 = vmor %vm1180, %vm1181
          %v1183 = vsel %vm1182, %v1175, %v1179
          %v1184 = vand.u32 2147483647, %v1174
          %vm1185 = vcmp.eq.f32.partialorder %v1184, 8.507059e+37
          %v1186 = vand.u32 %v1174, 2147483648
          %v1187 = vor.u32 1.1754944e-38, %v1186
          %v1188 = vsel %vm1185, %v1187, %v1183
          %s1189 = vtos %v1188
          %s1190 = smul.f32 %s1150, %s1189
          %v1191 = vstv %s1024
          %v1192 = vrcp.pop %v1191
          %v1193 = vmul.f32 %v1191, %v1192
          %v1194 = vsub.f32 1.0, %v1193
          %v1195 = vmul.f32 %v1192, %v1194
          %v1196 = vadd.f32 %v1192, %v1195
          %vm1197 = vweird.f32 %v1191
          %vm1198 = vweird.f32 %v1192
          %vm1199 = vmor %vm1197, %vm1198
          %v1200 = vsel %vm1199, %v1192, %v1196
          %v1201 = vand.u32 2147483647, %v1191
          %vm1202 = vcmp.eq.f32.partialorder %v1201, 8.507059e+37
          %v1203 = vand.u32 %v1191, 2147483648
          %v1204 = vor.u32 1.1754944e-38, %v1203
          %v1205 = vsel %vm1202, %v1204, %v1200
          %s1206 = vtos %v1205
          %s1207 = smul.f32 %s1153, %s1206
          %v1208 = vstv %s1081
          %v1209 = vrcp.pop %v1208
          %v1210 = vmul.f32 %v1208, %v1209
          %v1211 = vsub.f32 1.0, %v1210
          %v1212 = vmul.f32 %v1209, %v1211
          %v1213 = vadd.f32 %v1209, %v1212
          %vm1214 = vweird.f32 %v1208
          %vm1215 = vweird.f32 %v1209
          %vm1216 = vmor %vm1214, %vm1215
          %v1217 = vsel %vm1216, %v1209, %v1213
          %v1218 = vand.u32 2147483647, %v1208
          %vm1219 = vcmp.eq.f32.partialorder %v1218, 8.507059e+37
          %v1220 = vand.u32 %v1208, 2147483648
          %v1221 = vor.u32 1.1754944e-38, %v1220
          %v1222 = vsel %vm1219, %v1221, %v1217
          %s1223 = vtos %v1222
          %s1224 = smul.f32 %s1156, %s1223
          %v1225 = vstv %s1126
          %v1226 = vrcp.pop %v1225
          %v1227 = vmul.f32 %v1225, %v1226
          %v1228 = vsub.f32 1.0, %v1227
          %v1229 = vmul.f32 %v1226, %v1228
          %v1230 = vadd.f32 %v1226, %v1229
          %vm1231 = vweird.f32 %v1225
          %vm1232 = vweird.f32 %v1226
          %vm1233 = vmor %vm1231, %vm1232
          %v1234 = vsel %vm1233, %v1226, %v1230
          %v1235 = vand.u32 2147483647, %v1225
          %vm1236 = vcmp.eq.f32.partialorder %v1235, 8.507059e+37
          %v1237 = vand.u32 %v1225, 2147483648
          %v1238 = vor.u32 1.1754944e-38, %v1237
          %v1239 = vsel %vm1236, %v1238, %v1234
          %s1240 = vtos %v1239
          %s1241 = smul.f32 %s1128, %s1240
          %s1242 = sadd.f32 %s1173, %s1190
          %s1243 = sadd.f32 %s1242, %s1207
          %s1244 = sadd.f32 %s1243, %s1224
          %s1245 = sadd.f32 %s1244, %s1241
          %v1246 = vstv %s1245
          %v1247 = vrcp.pop %v1246
          %v1248 = vmul.f32 %v1246, %v1247
          %v1249 = vsub.f32 1.0, %v1248
          %v1250 = vmul.f32 %v1247, %v1249
          %v1251 = vadd.f32 %v1247, %v1250
          %vm1252 = vweird.f32 %v1246
          %vm1253 = vweird.f32 %v1247
          %vm1254 = vmor %vm1252, %vm1253
          %v1255 = vsel %vm1254, %v1247, %v1251
          %v1256 = vand.u32 2147483647, %v1246
          %vm1257 = vcmp.eq.f32.partialorder %v1256, 8.507059e+37
          %v1258 = vand.u32 %v1246, 2147483648
          %v1259 = vor.u32 1.1754944e-38, %v1258
          %v1260 = vsel %vm1257, %v1259, %v1255
          %s1261 = vtos %v1260
          %s1262 = smul.f32 %s1173, %s1261
          %s1263 = smul.f32 %s1190, %s1261
          %s1264 = smul.f32 %s1207, %s1261
          %s1265 = smul.f32 %s1224, %s1261
          %s1266 = smul.f32 %s1241, %s1261
          %v1267 = vstv %s1262
          %v1268 = vmul.f32 %v1267, %v534
          %v1269 = vstv %s1263
          %v1270 = vmul.f32 %v1269, %v535
          %v1271 = vadd.f32 %v1268, %v1270
          %v1272 = vstv %s1264
          %v1273 = vmul.f32 %v1272, %v537
          %v1274 = vadd.f32 %v1271, %v1273
          %v1275 = vstv %s1265
          %v1276 = vmul.f32 %v1275, %v539
          %v1277 = vadd.f32 %v1274, %v1276
          %v1278 = vstv %s1266
          %v1279 = vmul.f32 %v1278, %v541
          %v1280 = vadd.f32 %v1277, %v1279
          %v1281 = vmul.f32 %v203, %v1280
          %v1282 = vadd.f32 %v176, %v1281
          %v1283 = vmul.f32 %v206, %v1280
          %v1285 = vrot.slane %v1283, 5
          %v1286 = vrot.slane %v1285, 4
          %v1288 = vadd.f32 %v1282, %v1286
          %v1289 = vmul.f32 %v213, %v1280
          %v1291 = vrot.slane %v1289, 6
          %v1292 = vrot.slane %v1291, 4
          %v1294 = vadd.f32 %v1288, %v1292
          %v1295 = vmul.f32 %v220, %v1280
          %v1297 = vrot.slane %v1295, 7
          %v1298 = vrot.slane %v1297, 4
          %v1300 = vadd.f32 %v1294, %v1298
          %v1301 = vmul.f32 %v227, %v1280
          %v1303 = vrot.slane %v1301, 7
          %v1305 = vadd.f32 %v176, %v1303
          %v1306 = vmul.f32 %v233, %v1280
          %v1307 = vadd.f32 %v1305, %v1306
          %v1308 = vmul.f32 %v236, %v1280
          %v1310 = vrot.slane %v1308, 5
          %v1311 = vrot.slane %v1310, 4
          %v1313 = vadd.f32 %v1307, %v1311
          %v1314 = vmul.f32 %v243, %v1280
          %v1316 = vrot.slane %v1314, 6
          %v1317 = vrot.slane %v1316, 4
          %v1319 = vadd.f32 %v1313, %v1317
          %v1320 = vmul.f32 %v250, %v1280
          %v1322 = vrot.slane %v1320, 6
          %v1324 = vadd.f32 %v176, %v1322
          %v1325 = vmul.f32 %v256, %v1280
          %v1327 = vrot.slane %v1325, 7
          %v1329 = vadd.f32 %v1324, %v1327
          %v1330 = vmul.f32 %v262, %v1280
          %v1331 = vadd.f32 %v1329, %v1330
          %v1332 = vmul.f32 %v265, %v1280
          %v1334 = vrot.slane %v1332, 5
          %v1335 = vrot.slane %v1334, 4
          %v1337 = vadd.f32 %v1331, %v1335
          %v1338 = vmul.f32 %v272, %v1280
          %v1340 = vrot.slane %v1338, 5
          %v1342 = vadd.f32 %v176, %v1340
          %v1343 = vmul.f32 %v278, %v1280
          %v1345 = vrot.slane %v1343, 6
          %v1347 = vadd.f32 %v1342, %v1345
          %v1348 = vmul.f32 %v284, %v1280
          %v1350 = vrot.slane %v1348, 7
          %v1352 = vadd.f32 %v1347, %v1350
          %v1353 = vmul.f32 %v290, %v1280
          %v1354 = vadd.f32 %v1352, %v1353
          %v1356 = vperm.slane %v1300, 0
          %v1357 = vperm.slane %v1300, 4
          %v1361 = vperm.slane %v1319, 1
          %v1362 = vperm.slane %v1319, 5
          %v1366 = vperm.slane %v1337, 2
          %v1367 = vperm.slane %v1337, 6
          %v1371 = vperm.slane %v1354, 3
          %v1372 = vperm.slane %v1354, 7
          %v1375 = vsel %vm313, %v1356, %v1361
          %v1376 = vsel %vm313, %v1357, %v1362
          %v1377 = vsel %vm316, %v1375, %v1366
          %v1378 = vsel %vm316, %v1376, %v1367
          %v1379 = vsel %vm319, %v1377, %v1371
          %v1380 = vsel %vm319, %v1378, %v1372
          %v1381 = vtanh.pop %v1379
          %v1382 = vtanh.pop %v1380
          %p1383 = scmp.lt.s32.totalorder %s516, 0
          %s1384 = ssub.s32 0, %s516
          %s1385 = scalar_select %p1383, %s1384, %s516
          %s1386 = sdiv.u32.pop %s1385, 5
          %s1387 = srem.u32.pop %s1385, 5
          %s1388 = ssub.s32 0, %s1387
          %s1389 = scalar_select %p1383, %s1388, %s1387
          %p1390 = scmp.ne.s32.totalorder %s1389, 0
          %p1391 = scmp.lt.s32.totalorder %s1389, 0
          %p1392 = pnand %p1391, %p1390
          %p1393 = pneg %p1392
          %s1394 = sadd.s32 %s1389, 5
          %s1395 = scalar_select %p1393, %s1394, %s1389
          %s1396 = smul.u32 %s1395, 2
          %s1397 = smul.addr %s1396, 4
          %s1398 = scalar_lea.vmem [#allocation2], %s1397
          %1399 = vst [vmem:[%s1398] sm:$0xff] %v1280
          %v1402 = vrot.slane %v1382, 4
          %v1403 = vsel %vm328, %v1381, %v1402
          %s1405 = smul.addr %s1396, 4
          %s1406 = scalar_lea.vmem [#allocation3], %s1405
          %1407 = vst [vmem:[%s1406] sm:$0xff] %v1403
          %1409 = vst [vmem:[#allocation1] ss:$2 sm:$0xff] %v1280
          %v1410 = vld.sshfl [vmem:[#allocation1] sm:$0xff pattern:$0x75316420]
          %v1411 = vld.sshfl [vmem:[#allocation1 + $0x8] sm:$0xff pattern:$0x75316420]
          %v1414 = vsub.f32 %v1381, %v1410
          %v1415 = vsub.f32 %v1382, %v1411
          %v1416 = vmul.f32 %v1414, %v1414
          %v1417 = vmul.f32 %v1415, %v1415
          %v1418 = vsel %vm328, %v1416, 0.0
          %v1419 = vsel %vm328, %v1417, 0.0
          %v1420 = vadd.f32 %v1418, %v1419
          %1421 = vadd.xlane.f32.xlu0 %v1420
          %v1422 = vpop.xlane.xlu0 %1421
          %v1423 = vrot.slane %v1422, 4
          %v1424 = vadd.f32 %v1422, %v1423
          %v1425 = vrot.slane %v1424, 2
          %v1426 = vadd.f32 %v1424, %v1425
          %v1427 = vrot.slane %v1426, 1
          %v1428 = vadd.f32 %v1426, %v1427
          %s1429 = vtos %v1428
          %v1430 = vstv %s1429
          %v1431 = vrsqrt.pop %v1430
          %v1432 = vmul.f32 %v1431, %v1430
          %v1433 = vmul.f32 %v1432, %v1431
          %v1434 = vmul.f32 0.5, %v1433
          %v1435 = vsub.f32 1.5, %v1434
          %v1436 = vmul.f32 %v1431, %v1435
          %v1437 = vmul.f32 %v1430, %v1436
          %vm1438 = vcmp.eq.f32.partialorder %v1430, inf
          %v1439 = vsel %vm1438, %v1430, %v1437
          %vm1440 = vcmp.eq.f32.partialorder %v1430, 0.0
          %v1441 = vand.u32 %v1430, 2147483648
          %v1442 = vsel %vm1440, %v1441, %v1439
          %s1443 = vtos %v1442
          %v1444 = vmul.f32 %v1381, %v1381
          %v1445 = vmul.f32 %v1382, %v1382
          %v1446 = vsel %vm328, %v1444, 0.0
          %v1447 = vsel %vm328, %v1445, 0.0
          %v1448 = vadd.f32 %v1446, %v1447
          %1449 = vadd.xlane.f32.xlu0 %v1448
          %v1450 = vpop.xlane.xlu0 %1449
          %v1451 = vrot.slane %v1450, 4
          %v1452 = vadd.f32 %v1450, %v1451
          %v1453 = vrot.slane %v1452, 2
          %v1454 = vadd.f32 %v1452, %v1453
          %v1455 = vrot.slane %v1454, 1
          %v1456 = vadd.f32 %v1454, %v1455
          %s1457 = vtos %v1456
          %v1458 = vstv %s1457
          %v1459 = vrsqrt.pop %v1458
          %v1460 = vmul.f32 %v1459, %v1458
          %v1461 = vmul.f32 %v1460, %v1459
          %v1462 = vmul.f32 0.5, %v1461
          %v1463 = vsub.f32 1.5, %v1462
          %v1464 = vmul.f32 %v1459, %v1463
          %v1465 = vmul.f32 %v1458, %v1464
          %vm1466 = vcmp.eq.f32.partialorder %v1458, inf
          %v1467 = vsel %vm1466, %v1458, %v1465
          %vm1468 = vcmp.eq.f32.partialorder %v1458, 0.0
          %v1469 = vand.u32 %v1458, 2147483648
          %v1470 = vsel %vm1468, %v1469, %v1467
          %s1471 = vtos %v1470
          %s1472 = sadd.f32 %s1471, 1e-05
          %v1473 = vstv %s1472
          %v1474 = vrcp.pop %v1473
          %v1475 = vmul.f32 %v1473, %v1474
          %v1476 = vsub.f32 1.0, %v1475
          %v1477 = vmul.f32 %v1474, %v1476
          %v1478 = vadd.f32 %v1474, %v1477
          %vm1479 = vweird.f32 %v1473
          %vm1480 = vweird.f32 %v1474
          %vm1481 = vmor %vm1479, %vm1480
          %v1482 = vsel %vm1481, %v1474, %v1478
          %v1483 = vand.u32 2147483647, %v1473
          %vm1484 = vcmp.eq.f32.partialorder %v1483, 8.507059e+37
          %v1485 = vand.u32 %v1473, 2147483648
          %v1486 = vor.u32 1.1754944e-38, %v1485
          %v1487 = vsel %vm1484, %v1486, %v1482
          %s1488 = vtos %v1487
          %s1489 = smul.f32 %s1443, %s1488
          %p1490 = pneg %p523
          %p1491 = scmp.lt.f32.partialorder %s1489, %s522
          %p1492 = pnand %p1490, %p1491
          %p1493 = pneg %p1492
          %s1494 = scalar_select %p1493, 1, 0
          %v1495 = vstv %s1494
          %vm1496 = vcmp.eq.s32.totalorder %v1495, 1
          %v1497 = vsel %vm1496, %v1280, %v521
          %s1498 = scalar_select %p1493, %s1489, %s522
          %p1499 = scmp.lt.f32.partialorder %s1489, 0.001
          %p1500 = por %p523, %p1499
        $region41: #{tpu_custom_call.1} parent=27 // loop_footer
          %s520 = sadd.s32 1, %s516
        $region42: #{tpu_custom_call.1} parent=27 // loop_footer_branch
          %515 = sbr.rel target = $region38
        $region43: #{tpu_custom_call.1} parent=27 // loop_exit
          _
        %1501 = vst [vmem:[%s175] sm:$0xff] %v521
        %s1502 = sand.u32 %s75, 1
        %s1503 = scalar_lea.sflag [#allocation6], %s1502
        %s1504 = sand.u32 %s75, 1
        %s1505 = smul.addr %s1504, 8
        %s1506 = scalar_lea.vmem [#allocation9], %s1505
        // Predicated region
        $region44: #{tpu_custom_call.1} parent=27 // pred_check
          %p1507 = pneg %p85
        $region45: #{tpu_custom_call.1} parent=27 // pred_check_branch
          %1509 = sbr.rel (%p1507) target = $region47
        $region46: #{tpu_custom_call.1} parent=27 // pred_region
          %1511 = vsyncadd %s1503, 0
          %s1512 = smul.addr %s20, 2
          %s1513 = smul.addr %s1512, 4
          %s1514 = scalar_lea.hbm %s2, %s1513
          %s1516 = sshll.u32 %s1506, 4
          %s1517 = int_to_ptr.vmem [resolvable:$true] %s1516
          %s1518 = sshll.u32 %s1514, 4
          %s1519 = int_to_ptr.hbm [resolvable:$true] %s1518
          %1521 = dma.vmem_to_hbm [thread:$0]  %s1517, 128, %s1519, %s1503
        $region47: #{tpu_custom_call.1} parent=27 // pred_fallthru
          _
      $region28: #{tpu_custom_call.1} parent=5 // pred_fallthru
        _
      %p1522 = scmp.le.s32.totalorder 2, %s15
      // Predicated region
      $region48: #{tpu_custom_call.1} parent=5 // pred_check
        %p1523 = pneg %p1522
      $region49: #{tpu_custom_call.1} parent=5 // pred_check_branch
        %1525 = sbr.rel (%p1523) target = $region51
      $region50: #{tpu_custom_call.1} parent=5 // pred_region
        %s1526 = ssub.s32 %s15, 2
        // Predicated region
        $region52: #{tpu_custom_call.1} parent=50 // pred_check
          %p1527 = pneg %p91
        $region53: #{tpu_custom_call.1} parent=50 // pred_check_branch
          %1529 = sbr.rel (%p1527) target = $region55
        $region54: #{tpu_custom_call.1} parent=50 // pred_region
          %s1530 = sand.u32 %s76, 1
          %s1531 = scalar_lea.sflag [#allocation6], %s1530
          %s1532 = sand.u32 %s76, 1
          %s1533 = smul.addr %s1532, 8
          %s1534 = scalar_lea.vmem [#allocation9], %s1533
          %1536 = dma.done %s1531, 128
        $region55: #{tpu_custom_call.1} parent=50 // pred_fallthru
          _
      $region51: #{tpu_custom_call.1} parent=5 // pred_fallthru
        _
    $region6: #{tpu_custom_call.1} parent=1 // loop_footer
      %s19 = sadd.s32 1, %s15
    $region7: #{tpu_custom_call.1} parent=1 // loop_footer_branch
      %14 = sbr.rel target = $region3
    $region8: #{tpu_custom_call.1} parent=1 // loop_exit
      _
    %1537 = vsyncpa [#allocation5], 1
    %s1538 = scalar_lea.sflag [#allocation5], 1
    %1539 = vsyncpa %s1538, 1
    %1540 = vsyncpa [#allocation6], 1
    %s1541 = scalar_lea.sflag [#allocation6], 1
    %1542 = vsyncpa %s1541, 1
    %1543 = vsyncpa [#allocation7], 1
    %s1544 = scalar_lea.sflag [#allocation7], 1
    %1545 = vsyncpa %s1544, 1

</llo_original>
